<compile_context>
chip_gen: v7x
topology: tpu7x:2x2x1
jax: 0.10.0
libtpu: 0.0.40
codegen_flags: <defaults>
</compile_context>

<pallas_src>
import jax
import jax.numpy as jnp
from jax import lax
from jax.experimental import pallas as pl
from jax.experimental.pallas import tpu as pltpu


def _pick_tile_h(H, W):
    """Smallest divisor of H whose row-tile yields >= 128 output pixels (fills the MXU
    M dimension) while keeping per-step VMEM small and grid steps > 1 per image."""
    for th in range(1, H + 1):
        if H % th == 0 and th * W >= 128:
            return th
    return H


def _make_conv_relu_kernel(TH, W, Cin, Cout_p, KH, KW):
    M = TH * W
    K = KH * KW * Cin

    def kernel(x_ref, w_ref, b_ref, o_ref, patch_ref):
        # x_ref:     (1, TH+KH-1, W+KW-1, Cin) bf16 -- haloed, spatially padded row slab
        # w_ref:     (K, Cout_p)               bf16 -- 2-D im2col weight, Cout zero-padded
        # b_ref:     (1, Cout_p)               f32
        # o_ref:     (1, M, Cout_p)            f32  -- lane-dense output tile
        # patch_ref: (M, K)                    bf16 -- im2col staging scratch (VMEM)
        idx = 0
        for kh in range(KH):
            for kw in range(KW):
                patch_ref[:, idx * Cin:(idx + 1) * Cin] = (
                    x_ref[0, kh:kh + TH, kw:kw + W, :].reshape(M, Cin))
                idx += 1
        # One MXU matmul (K = KH*KW*Cin) with f32 accumulation, fused bias + ReLU.
        acc = jnp.dot(patch_ref[...], w_ref[...],
                      preferred_element_type=jnp.float32)
        acc = jnp.maximum(acc + b_ref[...], 0.0)
        o_ref[...] = acc.reshape(1, M, Cout_p).astype(o_ref.dtype)

    return kernel


def conv_forward(x_nchw, weight, bias):
    """Forward of Conv(inp_dim, out_dim, k, stride=1, bn=False, relu=True, bias=True).

    x_nchw : (N, Cin, H, W)      f32  (PyTorch NCHW)
    weight : (Cout, Cin, KH, KW) f32  (PyTorch OIHW)
    bias   : (Cout,)             f32
    returns: (N, Cout, H, W)     f32
    """
    N, Cin, H, W = x_nchw.shape
    Cout, wc, KH, KW = weight.shape
    assert wc == Cin
    # TODO(synk): stride != 1 and bn=True branches of the module are not implemented
    # (module defaults are stride=1, bn=False); even kernel sizes are not supported.
    assert KH % 2 == 1 and KW % 2 == 1

    ph, pw = (KH - 1) // 2, (KW - 1) // 2
    Wp = W + 2 * pw

    TH = _pick_tile_h(H, W)
    nH = H // TH
    M = TH * W
    K = KH * KW * Cin
    Cout_p = -(-Cout // 128) * 128          # pad output channels to full lane width

    # ---- wrapper-side layout glue (fuses into a couple of XLA copies) ----
    # NCHW -> NHWC, spatial zero-pad, bf16 cast; then gather overlapping row slabs so
    # every grid step gets its KH-1 halo rows with plain Blocked indexing.
    x = jnp.pad(jnp.transpose(x_nchw, (0, 2, 3, 1)).astype(jnp.bfloat16),
                ((0, 0), (ph, ph), (pw, pw), (0, 0)))
    slabs = [x[:, i * TH:i * TH + TH + KH - 1] for i in range(nH)]
    x_tiles = jnp.stack(slabs, axis=1).reshape(N * nH, TH + KH - 1, Wp, Cin)

    # Weight as a single 2-D im2col matrix (KH*KW*Cin, Cout_p); bias padded to Cout_p.
    w2d = jnp.transpose(weight, (2, 3, 1, 0)).reshape(K, Cout)
    w2d = jnp.pad(w2d, ((0, 0), (0, Cout_p - Cout))).astype(jnp.bfloat16)
    b2d = jnp.pad(bias.astype(jnp.float32).reshape(1, Cout),
                  ((0, 0), (0, Cout_p - Cout)))

    kernel = _make_conv_relu_kernel(TH, W, Cin, Cout_p, KH, KW)

    cost = pl.CostEstimate(
        flops=2 * N * H * W * Cout * Cin * KH * KW,
        transcendentals=0,
        bytes_accessed=(x_tiles.size * 2 + w2d.size * 2 + b2d.size * 4
                        + N * nH * M * Cout_p * 4),
    )

    out = pl.pallas_call(
        kernel,
        out_shape=jax.ShapeDtypeStruct((N * nH, M, Cout_p), jnp.float32),
        grid_spec=pltpu.PrefetchScalarGridSpec(
            num_scalar_prefetch=0,
            grid=(N * nH,),
            in_specs=[
                pl.BlockSpec((1, TH + KH - 1, Wp, Cin), lambda t: (t, 0, 0, 0)),
                pl.BlockSpec((K, Cout_p), lambda t: (0, 0)),
                pl.BlockSpec((1, Cout_p), lambda t: (0, 0)),
            ],
            out_specs=pl.BlockSpec((1, M, Cout_p), lambda t: (t, 0, 0)),
            scratch_shapes=[pltpu.VMEM((M, K), jnp.bfloat16)],
        ),
        compiler_params=pltpu.CompilerParams(
            dimension_semantics=("parallel",),
            vmem_limit_bytes=32 * 1024 * 1024,
        ),
        cost_estimate=cost,
    )(x_tiles, w2d, b2d)

    # (N*nH, TH*W, Cout_p) -> slice off channel padding -> (N, Cout, H, W)
    out = out.reshape(N, nH, TH, W, Cout_p)[..., :Cout].reshape(N, H, W, Cout)
    return jnp.transpose(out, (0, 3, 1, 2))


conv_forward = jax.jit(conv_forward)


if __name__ == "__main__":
    # Module config (Conv defaults: kernel_size=3, stride=1, bias=True, relu=True, bn=False)
    inp_dim, out_dim, ksize = 4, 8, 3
    N, H, W = 2, 16, 16

    key = jax.random.PRNGKey(0)
    kx, kw, kb = jax.random.split(key, 3)
    x = jax.random.normal(kx, (N, inp_dim, H, W), dtype=jnp.float32)
    weight = jax.random.normal(kw, (out_dim, inp_dim, ksize, ksize), dtype=jnp.float32) * 0.1
    bias = jax.random.normal(kb, (out_dim,), dtype=jnp.float32) * 0.1

    out = jax.block_until_ready(conv_forward(x, weight, bias))

    # Reference with the same bf16 operand rounding the kernel applies (MXU accumulates
    # exact bf16 products in f32), so the comparison stays tight.
    xb = x.astype(jnp.bfloat16).astype(jnp.float32)
    wb = weight.astype(jnp.bfloat16).astype(jnp.float32)
    ref = lax.conv_general_dilated(
        xb, wb, window_strides=(1, 1), padding=((1, 1), (1, 1)),
        dimension_numbers=("NCHW", "OIHW", "NCHW"),
        preferred_element_type=jnp.float32)
    ref = jnp.maximum(ref + bias.reshape(1, out_dim, 1, 1), 0.0)

    assert out.shape == (N, out_dim, H, W)
    assert jnp.allclose(out, ref, atol=1e-3, rtol=1e-3), float(jnp.max(jnp.abs(out - ref)))
    print("KERNEL_OK")
</pallas_src>

<mosaic_0001>
module attributes {stable_mosaic.version = 11 : i64} {
  func.func @kernel(%arg0: i32, %arg1: memref<1x10x18x4xbf16, #tpu.memory_space<vmem>>, %arg2: memref<36x128xbf16, #tpu.memory_space<vmem>>, %arg3: memref<1x128xf32, #tpu.memory_space<vmem>>, %arg4: memref<1x128x128xf32, #tpu.memory_space<vmem>>, %arg5: memref<128x36xbf16, #tpu.memory_space<vmem>>) attributes {dimension_semantics = [#tpu.dimension_semantics<parallel>], iteration_bounds = array<i64: 4>, scalar_prefetch = 0 : i64, scratch_operands = 1 : i64, tpu.core_type = #tpu.core_type<tc>, window_params = [{transform_indices = @transform_0, window_bounds = array<i64: 1, 10, 18, 4>}, {pipeline_mode = #tpu.pipeline_mode<synchronous>, transform_indices = @transform_1, window_bounds = array<i64: 36, 128>}, {pipeline_mode = #tpu.pipeline_mode<synchronous>, transform_indices = @transform_2, window_bounds = array<i64: 1, 128>}, {transform_indices = @transform_3, window_bounds = array<i64: 1, 128, 128>}]} {
    %c0 = arith.constant 0 : index
    %c0_0 = arith.constant 0 : index
    %c0_1 = arith.constant 0 : index
    %c0_2 = arith.constant 0 : index
    %0 = vector.load %arg1[%c0, %c0_0, %c0_1, %c0_2] : memref<1x10x18x4xbf16, #tpu.memory_space<vmem>>, vector<1x8x16x4xbf16>
    %1 = vector.shape_cast %0 : vector<1x8x16x4xbf16> to vector<8x16x4xbf16>
    %2 = vector.shape_cast %1 : vector<8x16x4xbf16> to vector<128x4xbf16>
    %c0_3 = arith.constant 0 : index
    %c0_4 = arith.constant 0 : index
    %3 = vector.load %arg5[%c0_3, %c0_4] : memref<128x36xbf16, #tpu.memory_space<vmem>>, vector<128x4xbf16>
    tpu.vector_store %arg5[%c0_3, %c0_4], %2 {strides = array<i32>} : memref<128x36xbf16, #tpu.memory_space<vmem>>, vector<128x4xbf16>,
    %c0_5 = arith.constant 0 : index
    %c0_6 = arith.constant 0 : index
    %c1 = arith.constant 1 : index
    %c0_7 = arith.constant 0 : index
    %4 = vector.load %arg1[%c0_5, %c0_6, %c1, %c0_7] : memref<1x10x18x4xbf16, #tpu.memory_space<vmem>>, vector<1x8x16x4xbf16>
    %5 = vector.shape_cast %4 : vector<1x8x16x4xbf16> to vector<8x16x4xbf16>
    %6 = vector.shape_cast %5 : vector<8x16x4xbf16> to vector<128x4xbf16>
    %c0_8 = arith.constant 0 : index
    %c4 = arith.constant 4 : index
    %7 = vector.load %arg5[%c0_8, %c4] : memref<128x36xbf16, #tpu.memory_space<vmem>>, vector<128x4xbf16>
    tpu.vector_store %arg5[%c0_8, %c4], %6 {strides = array<i32>} : memref<128x36xbf16, #tpu.memory_space<vmem>>, vector<128x4xbf16>,
    %c0_9 = arith.constant 0 : index
    %c0_10 = arith.constant 0 : index
    %c2 = arith.constant 2 : index
    %c0_11 = arith.constant 0 : index
    %8 = vector.load %arg1[%c0_9, %c0_10, %c2, %c0_11] : memref<1x10x18x4xbf16, #tpu.memory_space<vmem>>, vector<1x8x16x4xbf16>
    %9 = vector.shape_cast %8 : vector<1x8x16x4xbf16> to vector<8x16x4xbf16>
    %10 = vector.shape_cast %9 : vector<8x16x4xbf16> to vector<128x4xbf16>
    %c0_12 = arith.constant 0 : index
    %c8 = arith.constant 8 : index
    %11 = vector.load %arg5[%c0_12, %c8] : memref<128x36xbf16, #tpu.memory_space<vmem>>, vector<128x4xbf16>
    tpu.vector_store %arg5[%c0_12, %c8], %10 {strides = array<i32>} : memref<128x36xbf16, #tpu.memory_space<vmem>>, vector<128x4xbf16>,
    %c0_13 = arith.constant 0 : index
    %c1_14 = arith.constant 1 : index
    %c0_15 = arith.constant 0 : index
    %c0_16 = arith.constant 0 : index
    %12 = vector.load %arg1[%c0_13, %c1_14, %c0_15, %c0_16] : memref<1x10x18x4xbf16, #tpu.memory_space<vmem>>, vector<1x8x16x4xbf16>
    %13 = vector.shape_cast %12 : vector<1x8x16x4xbf16> to vector<8x16x4xbf16>
    %14 = vector.shape_cast %13 : vector<8x16x4xbf16> to vector<128x4xbf16>
    %c0_17 = arith.constant 0 : index
    %c12 = arith.constant 12 : index
    %15 = vector.load %arg5[%c0_17, %c12] : memref<128x36xbf16, #tpu.memory_space<vmem>>, vector<128x4xbf16>
    tpu.vector_store %arg5[%c0_17, %c12], %14 {strides = array<i32>} : memref<128x36xbf16, #tpu.memory_space<vmem>>, vector<128x4xbf16>,
    %c0_18 = arith.constant 0 : index
    %c1_19 = arith.constant 1 : index
    %c1_20 = arith.constant 1 : index
    %c0_21 = arith.constant 0 : index
    %16 = vector.load %arg1[%c0_18, %c1_19, %c1_20, %c0_21] : memref<1x10x18x4xbf16, #tpu.memory_space<vmem>>, vector<1x8x16x4xbf16>
    %17 = vector.shape_cast %16 : vector<1x8x16x4xbf16> to vector<8x16x4xbf16>
    %18 = vector.shape_cast %17 : vector<8x16x4xbf16> to vector<128x4xbf16>
    %c0_22 = arith.constant 0 : index
    %c16 = arith.constant 16 : index
    %19 = vector.load %arg5[%c0_22, %c16] : memref<128x36xbf16, #tpu.memory_space<vmem>>, vector<128x4xbf16>
    tpu.vector_store %arg5[%c0_22, %c16], %18 {strides = array<i32>} : memref<128x36xbf16, #tpu.memory_space<vmem>>, vector<128x4xbf16>,
    %c0_23 = arith.constant 0 : index
    %c1_24 = arith.constant 1 : index
    %c2_25 = arith.constant 2 : index
    %c0_26 = arith.constant 0 : index
    %20 = vector.load %arg1[%c0_23, %c1_24, %c2_25, %c0_26] : memref<1x10x18x4xbf16, #tpu.memory_space<vmem>>, vector<1x8x16x4xbf16>
    %21 = vector.shape_cast %20 : vector<1x8x16x4xbf16> to vector<8x16x4xbf16>
    %22 = vector.shape_cast %21 : vector<8x16x4xbf16> to vector<128x4xbf16>
    %c0_27 = arith.constant 0 : index
    %c20 = arith.constant 20 : index
    %23 = vector.load %arg5[%c0_27, %c20] : memref<128x36xbf16, #tpu.memory_space<vmem>>, vector<128x4xbf16>
    tpu.vector_store %arg5[%c0_27, %c20], %22 {strides = array<i32>} : memref<128x36xbf16, #tpu.memory_space<vmem>>, vector<128x4xbf16>,
    %c0_28 = arith.constant 0 : index
    %c2_29 = arith.constant 2 : index
    %c0_30 = arith.constant 0 : index
    %c0_31 = arith.constant 0 : index
    %24 = vector.load %arg1[%c0_28, %c2_29, %c0_30, %c0_31] : memref<1x10x18x4xbf16, #tpu.memory_space<vmem>>, vector<1x8x16x4xbf16>
    %25 = vector.shape_cast %24 : vector<1x8x16x4xbf16> to vector<8x16x4xbf16>
    %26 = vector.shape_cast %25 : vector<8x16x4xbf16> to vector<128x4xbf16>
    %c0_32 = arith.constant 0 : index
    %c24 = arith.constant 24 : index
    %27 = vector.load %arg5[%c0_32, %c24] : memref<128x36xbf16, #tpu.memory_space<vmem>>, vector<128x4xbf16>
    tpu.vector_store %arg5[%c0_32, %c24], %26 {strides = array<i32>} : memref<128x36xbf16, #tpu.memory_space<vmem>>, vector<128x4xbf16>,
    %c0_33 = arith.constant 0 : index
    %c2_34 = arith.constant 2 : index
    %c1_35 = arith.constant 1 : index
    %c0_36 = arith.constant 0 : index
    %28 = vector.load %arg1[%c0_33, %c2_34, %c1_35, %c0_36] : memref<1x10x18x4xbf16, #tpu.memory_space<vmem>>, vector<1x8x16x4xbf16>
    %29 = vector.shape_cast %28 : vector<1x8x16x4xbf16> to vector<8x16x4xbf16>
    %30 = vector.shape_cast %29 : vector<8x16x4xbf16> to vector<128x4xbf16>
    %c0_37 = arith.constant 0 : index
    %c28 = arith.constant 28 : index
    %31 = vector.load %arg5[%c0_37, %c28] : memref<128x36xbf16, #tpu.memory_space<vmem>>, vector<128x4xbf16>
    tpu.vector_store %arg5[%c0_37, %c28], %30 {strides = array<i32>} : memref<128x36xbf16, #tpu.memory_space<vmem>>, vector<128x4xbf16>,
    %c0_38 = arith.constant 0 : index
    %c2_39 = arith.constant 2 : index
    %c2_40 = arith.constant 2 : index
    %c0_41 = arith.constant 0 : index
    %32 = vector.load %arg1[%c0_38, %c2_39, %c2_40, %c0_41] : memref<1x10x18x4xbf16, #tpu.memory_space<vmem>>, vector<1x8x16x4xbf16>
    %33 = vector.shape_cast %32 : vector<1x8x16x4xbf16> to vector<8x16x4xbf16>
    %34 = vector.shape_cast %33 : vector<8x16x4xbf16> to vector<128x4xbf16>
    %c0_42 = arith.constant 0 : index
    %c32 = arith.constant 32 : index
    %35 = vector.load %arg5[%c0_42, %c32] : memref<128x36xbf16, #tpu.memory_space<vmem>>, vector<128x4xbf16>
    tpu.vector_store %arg5[%c0_42, %c32], %34 {strides = array<i32>} : memref<128x36xbf16, #tpu.memory_space<vmem>>, vector<128x4xbf16>,
    %c0_43 = arith.constant 0 : index
    %c0_44 = arith.constant 0 : index
    %36 = vector.load %arg5[%c0_43, %c0_44] : memref<128x36xbf16, #tpu.memory_space<vmem>>, vector<128x36xbf16>
    %c0_45 = arith.constant 0 : index
    %c0_46 = arith.constant 0 : index
    %37 = vector.load %arg2[%c0_45, %c0_46] : memref<36x128xbf16, #tpu.memory_space<vmem>>, vector<36x128xbf16>
    %cst = arith.constant dense<0.000000e+00> : vector<128x128xf32>
    %38 = tpu.matmul %36, %37, %cst {dimension_numbers = #tpu.dot_dimension_numbers<[1], [0], [0], [1], [0, 0, 1, 1], [], []>} : vector<128x36xbf16>, vector<36x128xbf16>, vector<128x128xf32> -> vector<128x128xf32>
    %c0_47 = arith.constant 0 : index
    %c0_48 = arith.constant 0 : index
    %39 = vector.load %arg3[%c0_47, %c0_48] : memref<1x128xf32, #tpu.memory_space<vmem>>, vector<1x128xf32>
    %40 = vector.broadcast %39 : vector<1x128xf32> to vector<128x128xf32>
    %41 = arith.addf %38, %40 : vector<128x128xf32>
    %cst_49 = arith.constant 0.000000e+00 : f32
    %42 = vector.broadcast %cst_49 : f32 to vector<128x128xf32>
    %43 = arith.maximumf %41, %42 : vector<128x128xf32>
    %44 = vector.shape_cast %43 : vector<128x128xf32> to vector<1x128x128xf32>
    %c0_50 = arith.constant 0 : index
    %c0_51 = arith.constant 0 : index
    %c0_52 = arith.constant 0 : index
    %45 = vector.load %arg4[%c0_50, %c0_51, %c0_52] : memref<1x128x128xf32, #tpu.memory_space<vmem>>, vector<1x128x128xf32>
    tpu.vector_store %arg4[%c0_50, %c0_51, %c0_52], %44 {strides = array<i32>} : memref<1x128x128xf32, #tpu.memory_space<vmem>>, vector<1x128x128xf32>,
    return
  }
  func.func @transform_0(%arg0: i32) -> (i32, i32, i32, i32) {
    %c0_i32 = arith.constant 0 : i32
    %c0_i32_0 = arith.constant 0 : i32
    %c0_i32_1 = arith.constant 0 : i32
    %c0_i32_2 = arith.constant 0 : i32
    return %arg0, %c0_i32, %c0_i32_0, %c0_i32_1 : i32, i32, i32, i32
  }
  func.func @transform_1(%arg0: i32) -> (i32, i32) {
    %c0_i32 = arith.constant 0 : i32
    %c0_i32_0 = arith.constant 0 : i32
    %c0_i32_1 = arith.constant 0 : i32
    return %c0_i32, %c0_i32_0 : i32, i32
  }
  func.func @transform_2(%arg0: i32) -> (i32, i32) {
    %c0_i32 = arith.constant 0 : i32
    %c0_i32_0 = arith.constant 0 : i32
    %c0_i32_1 = arith.constant 0 : i32
    return %c0_i32, %c0_i32_0 : i32, i32
  }
  func.func @transform_3(%arg0: i32) -> (i32, i32, i32) {
    %c0_i32 = arith.constant 0 : i32
    %c0_i32_0 = arith.constant 0 : i32
    %c0_i32_1 = arith.constant 0 : i32
    return %arg0, %c0_i32, %c0_i32_0 : i32, i32, i32
  }
}

</mosaic_0001>

<llo_original>
// kernel: conv_forward.1
$region0: #{conv_forward.1}
  #allocation0 [shape = 'u32[]', space=smem, size = 0x4, offset = 0x4, fixed_abs, tag = 'smem constant byte address 0x4 - core index']
  #allocation1 [shape = 'u32[144,128]{1,0:T(1,128)}', space=vmem, size = 0x12000, scoped, tag = 'internal scratch']
  #allocation2 [shape = 'bf16[128,36]{1,0:T(16,128)(2,1)}', space=vmem, size = 0x8000, scoped, tag = 'scratch operand']
  %s0 = inlined_call_operand.vmem [shape: bf16[4,10,18,4], index: 0, kind: input, shape index: {}]
  %s1 = inlined_call_operand.vmem [shape: bf16[36,128], index: 1, kind: input, shape index: {}]
  %s2 = inlined_call_operand.vmem [shape: f32[1,128], index: 2, kind: input, shape index: {}]
  %s3 = inlined_call_operand.vmem [shape: f32[4,128,128], index: 3, kind: output, shape index: {}]
  %s4 = sld [smem:[#allocation0]]
  $region45: #{conv_forward.1} parent=0
    _
  %s6 = ssub.s32 1, %s4
  %s7 = scalar_select 0, %s6, %s4
  loop: start=0, step=1, limit=6
  $region2: #{conv_forward.1} parent=0 // loop_pre_header
    _
  $region3: #{conv_forward.1} parent=0 // loop_header
    %s9 = sphi 0, %s13
    %p10 = scmp.ge.s32.totalorder %s9, 6
    %s19 = sphi 0, %s21
    %s22 = sphi 0, %s19
    %s23 = sphi 0, %s22
    %s39 = sphi 0, %s23
    %s43 = sphi 0, %s43
    %s45 = sphi 0, %s43
    %s46 = sphi 0, %s45
    %s60 = sphi 0, %s46
    %s64 = sphi 0, %s64
    %s66 = sphi 0, %s64
    %s67 = sphi 0, %s66
    %s81 = sphi 0, %s67
    %s87 = sphi 0, %s89
    %s90 = sphi 0, %s87
    %s91 = sphi 0, %s90
    %s107 = sphi 0, %s91
  $region4: #{conv_forward.1} parent=0 // loop_header_branch
    %12 = sbr.rel (%p10) target = $region8
  $region5: #{conv_forward.1} parent=0 // loop_body
    %s14 = ssub.s32 %s9, 1
    %s15 = ssub.s32 %s9, 2
    %s16 = sadd.s32 %s9, 1
    %s17 = ssub.s32 %s9, %s16
    %p18 = scmp.eq.s32.totalorder %s17, 0
    %s20 = sadd.s32 %s19, 1
    %s21 = scalar_select %p18, %s19, %s20
    %p24 = pneg %p18
    %p25 = scmp.eq.s32.totalorder %s9, 3
    %p26 = por %p24, %p25
    %p27 = scmp.ne.s32.totalorder %s19, %s22
    %p28 = scmp.eq.s32.totalorder %s9, 0
    %p29 = por %p27, %p28
    %p30 = scmp.ne.s32.totalorder %s19, %s22
    %p31 = scmp.eq.s32.totalorder %s14, 3
    %p32 = por %p30, %p31
    %p33 = scmp.ne.s32.totalorder %s22, %s23
    %p34 = scmp.eq.s32.totalorder %s14, 0
    %p35 = por %p33, %p34
    %p36 = scmp.ne.s32.totalorder %s22, %s23
    %p37 = scmp.eq.s32.totalorder %s15, 3
    %p38 = por %p36, %p37
    %p40 = scmp.ne.s32.totalorder %s23, %s39
    %p41 = scmp.eq.s32.totalorder %s15, 0
    %p42 = por %p40, %p41
    %s44 = sadd.s32 %s43, 1
    %p47 = scmp.eq.s32.totalorder %s9, 3
    %p48 = scmp.ne.s32.totalorder %s43, %s45
    %p49 = scmp.eq.s32.totalorder %s9, 0
    %p50 = por %p48, %p49
    %p51 = scmp.ne.s32.totalorder %s43, %s45
    %p52 = scmp.eq.s32.totalorder %s14, 3
    %p53 = por %p51, %p52
    %p54 = scmp.ne.s32.totalorder %s45, %s46
    %p55 = scmp.eq.s32.totalorder %s14, 0
    %p56 = por %p54, %p55
    %p57 = scmp.ne.s32.totalorder %s45, %s46
    %p58 = scmp.eq.s32.totalorder %s15, 3
    %p59 = por %p57, %p58
    %p61 = scmp.ne.s32.totalorder %s46, %s60
    %p62 = scmp.eq.s32.totalorder %s15, 0
    %p63 = por %p61, %p62
    %s65 = sadd.s32 %s64, 1
    %p68 = scmp.eq.s32.totalorder %s9, 3
    %p69 = scmp.ne.s32.totalorder %s64, %s66
    %p70 = scmp.eq.s32.totalorder %s9, 0
    %p71 = por %p69, %p70
    %p72 = scmp.ne.s32.totalorder %s64, %s66
    %p73 = scmp.eq.s32.totalorder %s14, 3
    %p74 = por %p72, %p73
    %p75 = scmp.ne.s32.totalorder %s66, %s67
    %p76 = scmp.eq.s32.totalorder %s14, 0
    %p77 = por %p75, %p76
    %p78 = scmp.ne.s32.totalorder %s66, %s67
    %p79 = scmp.eq.s32.totalorder %s15, 3
    %p80 = por %p78, %p79
    %p82 = scmp.ne.s32.totalorder %s67, %s81
    %p83 = scmp.eq.s32.totalorder %s15, 0
    %p84 = por %p82, %p83
    %s85 = ssub.s32 %s9, %s16
    %p86 = scmp.eq.s32.totalorder %s85, 0
    %s88 = sadd.s32 %s87, 1
    %s89 = scalar_select %p86, %s87, %s88
    %p92 = pneg %p86
    %p93 = scmp.eq.s32.totalorder %s9, 3
    %p94 = por %p92, %p93
    %p95 = scmp.ne.s32.totalorder %s87, %s90
    %p96 = scmp.eq.s32.totalorder %s9, 0
    %p97 = por %p95, %p96
    %p98 = scmp.ne.s32.totalorder %s87, %s90
    %p99 = scmp.eq.s32.totalorder %s14, 3
    %p100 = por %p98, %p99
    %p101 = scmp.ne.s32.totalorder %s90, %s91
    %p102 = scmp.eq.s32.totalorder %s14, 0
    %p103 = por %p101, %p102
    %p104 = scmp.ne.s32.totalorder %s90, %s91
    %p105 = scmp.eq.s32.totalorder %s15, 3
    %p106 = por %p104, %p105
    %p108 = scmp.ne.s32.totalorder %s91, %s107
    %p109 = scmp.eq.s32.totalorder %s15, 0
    %p110 = por %p108, %p109
    %p111 = scmp.le.s32.totalorder 1, %s9
    %p112 = scmp.lt.s32.totalorder %s9, 5
    %p113 = pnand %p111, %p112
    %p114 = pneg %p113
    // Predicated region
    $region9: #{conv_forward.1} parent=5 // pred_check
      _
    $region10: #{conv_forward.1} parent=5 // pred_check_branch
      %116 = sbr.rel (%p113) target = $region12
    $region11: #{conv_forward.1} parent=5 // pred_region
      %s117 = ssub.s32 %s9, 1
      // Predicated region
      $region13: #{conv_forward.1} parent=11 // pred_check
        %p118 = pneg %p56
      $region14: #{conv_forward.1} parent=11 // pred_check_branch
        %120 = sbr.rel (%p118) target = $region16
      $region15: #{conv_forward.1} parent=11 // pred_region
        _
      $region16: #{conv_forward.1} parent=11 // pred_fallthru
        _
      // Predicated region
      $region17: #{conv_forward.1} parent=11 // pred_check
        %p121 = pneg %p77
      $region18: #{conv_forward.1} parent=11 // pred_check_branch
        %123 = sbr.rel (%p121) target = $region20
      $region19: #{conv_forward.1} parent=11 // pred_region
        _
      $region20: #{conv_forward.1} parent=11 // pred_fallthru
        _
    $region12: #{conv_forward.1} parent=5 // pred_fallthru
      _
    %p124 = scmp.lt.s32.totalorder %s9, 4
    // Predicated region
    $region21: #{conv_forward.1} parent=5 // pred_check
      %p125 = pneg %p124
    $region22: #{conv_forward.1} parent=5 // pred_check_branch
      %127 = sbr.rel (%p125) target = $region24
    $region23: #{conv_forward.1} parent=5 // pred_region
      // Predicated region
      $region25: #{conv_forward.1} parent=23 // pred_check
        %p128 = pneg %p29
      $region26: #{conv_forward.1} parent=23 // pred_check_branch
        %130 = sbr.rel (%p128) target = $region28
      $region27: #{conv_forward.1} parent=23 // pred_region
        %p131 = scmp.lt.s32.totalorder %s9, 3
        %s132 = scalar_select %p131, %s9, 3
        %s133 = smul.addr %s132, 30
        %s134 = smul.addr %s133, 4
        %s135 = scalar_lea.vmem %s0, %s134
      $region28: #{conv_forward.1} parent=23 // pred_fallthru
        _
    $region24: #{conv_forward.1} parent=5 // pred_fallthru
      _
    %p136 = scmp.le.s32.totalorder 1, %s9
    %p137 = scmp.lt.s32.totalorder %s9, 5
    %p138 = pnand %p136, %p137
    %p139 = pneg %p138
    // Predicated region
    $region29: #{conv_forward.1} parent=5 // pred_check
      _
    $region30: #{conv_forward.1} parent=5 // pred_check_branch
      %141 = sbr.rel (%p138) target = $region32
    $region31: #{conv_forward.1} parent=5 // pred_region
      %s142 = ssub.s32 %s9, 1
      %p143 = scmp.lt.s32.totalorder %s14, 3
      %s144 = scalar_select %p143, %s14, 3
      %s145 = smul.addr %s144, 30
      %s146 = smul.addr %s145, 4
      %s147 = scalar_lea.vmem %s0, %s146
      %p148 = pneg %p35
      %p149 = pneg %p32
      %p150 = pneg %p56
      %p151 = pneg %p53
      %p152 = pneg %p77
      %p153 = pneg %p74
      %p154 = pneg %p103
      %p155 = pneg %p100
      %p156 = scmp.lt.s32.totalorder %s14, 3
      %s157 = scalar_select %p156, %s14, 3
      %s158 = smul.addr %s157, 16
      %s159 = smul.addr %s158, 8
      %s160 = scalar_lea.vmem %s3, %s159
      %p161 = scmp.lt.s32.totalorder %s14, 3
      %s162 = scalar_select %p161, %s14, 3
      %s163 = smul.addr %s162, 30
      %s164 = smul.addr %s163, 4
      %s165 = scalar_lea.vmem %s0, %s164
      %p166 = scmp.lt.s32.totalorder %s14, 3
      %s167 = scalar_select %p166, %s14, 3
      %s168 = smul.addr %s167, 16
      %s169 = smul.addr %s168, 8
      %s170 = scalar_lea.vmem %s3, %s169
      %v172 = vld [vmem:[%s165] sm:$0xf]
      %v173 = vld [vmem:[%s165 + $0x4] sm:$0xf]
      %v174 = vld [vmem:[%s165 + $0xc] sm:$0xf]
      %v175 = vld [vmem:[%s165 + $0x10] sm:$0xf]
      %v176 = vld [vmem:[%s165 + $0x18] sm:$0xf]
      %v177 = vld [vmem:[%s165 + $0x1c] sm:$0xf]
      %v178 = vld [vmem:[%s165 + $0x24] sm:$0xf]
      %v179 = vld [vmem:[%s165 + $0x28] sm:$0xf]
      %v180 = vld [vmem:[%s165 + $0x30] sm:$0xf]
      %v181 = vld [vmem:[%s165 + $0x34] sm:$0xf]
      %v182 = vld [vmem:[%s165 + $0x3c] sm:$0xf]
      %v183 = vld [vmem:[%s165 + $0x40] sm:$0xf]
      %v184 = vld [vmem:[%s165 + $0x48] sm:$0xf]
      %v185 = vld [vmem:[%s165 + $0x4c] sm:$0xf]
      %v186 = vld [vmem:[%s165 + $0x54] sm:$0xf]
      %v187 = vld [vmem:[%s165 + $0x58] sm:$0xf]
      %v204 = vunpack.c.l.b16 %v172
      %v205 = vunpack.c.l.b16 %v173
      %v206 = vunpack.c.l.b16 %v174
      %v207 = vunpack.c.l.b16 %v175
      %v208 = vunpack.c.l.b16 %v176
      %v209 = vunpack.c.l.b16 %v177
      %v210 = vunpack.c.l.b16 %v178
      %v211 = vunpack.c.l.b16 %v179
      %v212 = vunpack.c.l.b16 %v180
      %v213 = vunpack.c.l.b16 %v181
      %v214 = vunpack.c.l.b16 %v182
      %v215 = vunpack.c.l.b16 %v183
      %v216 = vunpack.c.l.b16 %v184
      %v217 = vunpack.c.l.b16 %v185
      %v218 = vunpack.c.l.b16 %v186
      %v219 = vunpack.c.l.b16 %v187
      %v220 = vpack.c.b16 %v205, %v204
      %v221 = vpack.c.b16 %v207, %v206
      %v222 = vpack.c.b16 %v209, %v208
      %v223 = vpack.c.b16 %v211, %v210
      %v224 = vpack.c.b16 %v213, %v212
      %v225 = vpack.c.b16 %v215, %v214
      %v226 = vpack.c.b16 %v217, %v216
      %v227 = vpack.c.b16 %v219, %v218
      %vm236 = vcmask 31744
      %237 = vst.msk [vmem:[#allocation2] sm:$0xff] %vm236, %v220
      %238 = vst.msk [vmem:[#allocation2 + $0x8] sm:$0xff] %vm236, %v221
      %239 = vst.msk [vmem:[#allocation2 + $0x10] sm:$0xff] %vm236, %v222
      %240 = vst.msk [vmem:[#allocation2 + $0x18] sm:$0xff] %vm236, %v223
      %241 = vst.msk [vmem:[#allocation2 + $0x20] sm:$0xff] %vm236, %v224
      %242 = vst.msk [vmem:[#allocation2 + $0x28] sm:$0xff] %vm236, %v225
      %243 = vst.msk [vmem:[#allocation2 + $0x30] sm:$0xff] %vm236, %v226
      %244 = vst.msk [vmem:[#allocation2 + $0x38] sm:$0xff] %vm236, %v227
      %v245 = vld [vmem:[%s165] sm:$0xf]
      %v246 = vld [vmem:[%s165 + $0x4] sm:$0xf]
      %v247 = vld [vmem:[%s165 + $0x8] sm:$0x1]
      %v248 = vld [vmem:[%s165 + $0xc] sm:$0xf]
      %v249 = vld [vmem:[%s165 + $0x10] sm:$0xf]
      %v250 = vld [vmem:[%s165 + $0x14] sm:$0x1]
      %v251 = vld [vmem:[%s165 + $0x18] sm:$0xf]
      %v252 = vld [vmem:[%s165 + $0x1c] sm:$0xf]
      %v253 = vld [vmem:[%s165 + $0x20] sm:$0x1]
      %v254 = vld [vmem:[%s165 + $0x24] sm:$0xf]
      %v255 = vld [vmem:[%s165 + $0x28] sm:$0xf]
      %v256 = vld [vmem:[%s165 + $0x2c] sm:$0x1]
      %v257 = vld [vmem:[%s165 + $0x30] sm:$0xf]
      %v258 = vld [vmem:[%s165 + $0x34] sm:$0xf]
      %v259 = vld [vmem:[%s165 + $0x38] sm:$0x1]
      %v260 = vld [vmem:[%s165 + $0x3c] sm:$0xf]
      %v261 = vld [vmem:[%s165 + $0x40] sm:$0xf]
      %v262 = vld [vmem:[%s165 + $0x44] sm:$0x1]
      %v263 = vld [vmem:[%s165 + $0x48] sm:$0xf]
      %v264 = vld [vmem:[%s165 + $0x4c] sm:$0xf]
      %v265 = vld [vmem:[%s165 + $0x50] sm:$0x1]
      %v266 = vld [vmem:[%s165 + $0x54] sm:$0xf]
      %v267 = vld [vmem:[%s165 + $0x58] sm:$0xf]
      %v268 = vld [vmem:[%s165 + $0x5c] sm:$0x1]
      %vm269 = vsmask.f32 3328
      %vm270 = vsmask.f32 7440
      %vm271 = vmor %vm269, %vm270
      %v273 = vshrl.u32 %v245, 16
      %v275 = vrot.slane %v273, 4
      %v276 = vshll.u32 %v245, 16
      %v278 = vrot.slane %v276, 5
      %v279 = vor.u32 %v275, %v278
      %v280 = vrot.slane %v279, 4
      %v282 = vshll.u32 %v246, 16
      %v284 = vrot.slane %v282, 5
      %v285 = vsel %vm271, %v280, %v284
      %v286 = vshrl.u32 %v246, 16
      %v288 = vrot.slane %v286, 4
      %v289 = vor.u32 %v288, %v284
      %v290 = vrot.slane %v289, 4
      %v292 = vshll.u32 %v247, 16
      %v294 = vrot.slane %v292, 5
      %v295 = vsel %vm271, %v290, %v294
      %v297 = vshrl.u32 %v248, 16
      %v299 = vrot.slane %v297, 4
      %v300 = vshll.u32 %v248, 16
      %v302 = vrot.slane %v300, 5
      %v303 = vor.u32 %v299, %v302
      %v304 = vrot.slane %v303, 4
      %v306 = vshll.u32 %v249, 16
      %v308 = vrot.slane %v306, 5
      %v309 = vsel %vm271, %v304, %v308
      %v310 = vshrl.u32 %v249, 16
      %v312 = vrot.slane %v310, 4
      %v313 = vor.u32 %v312, %v308
      %v314 = vrot.slane %v313, 4
      %v316 = vshll.u32 %v250, 16
      %v318 = vrot.slane %v316, 5
      %v319 = vsel %vm271, %v314, %v318
      %v321 = vshrl.u32 %v251, 16
      %v323 = vrot.slane %v321, 4
      %v324 = vshll.u32 %v251, 16
      %v326 = vrot.slane %v324, 5
      %v327 = vor.u32 %v323, %v326
      %v328 = vrot.slane %v327, 4
      %v330 = vshll.u32 %v252, 16
      %v332 = vrot.slane %v330, 5
      %v333 = vsel %vm271, %v328, %v332
      %v334 = vshrl.u32 %v252, 16
      %v336 = vrot.slane %v334, 4
      %v337 = vor.u32 %v336, %v332
      %v338 = vrot.slane %v337, 4
      %v340 = vshll.u32 %v253, 16
      %v342 = vrot.slane %v340, 5
      %v343 = vsel %vm271, %v338, %v342
      %v345 = vshrl.u32 %v254, 16
      %v347 = vrot.slane %v345, 4
      %v348 = vshll.u32 %v254, 16
      %v350 = vrot.slane %v348, 5
      %v351 = vor.u32 %v347, %v350
      %v352 = vrot.slane %v351, 4
      %v354 = vshll.u32 %v255, 16
      %v356 = vrot.slane %v354, 5
      %v357 = vsel %vm271, %v352, %v356
      %v358 = vshrl.u32 %v255, 16
      %v360 = vrot.slane %v358, 4
      %v361 = vor.u32 %v360, %v356
      %v362 = vrot.slane %v361, 4
      %v364 = vshll.u32 %v256, 16
      %v366 = vrot.slane %v364, 5
      %v367 = vsel %vm271, %v362, %v366
      %v369 = vshrl.u32 %v257, 16
      %v371 = vrot.slane %v369, 4
      %v372 = vshll.u32 %v257, 16
      %v374 = vrot.slane %v372, 5
      %v375 = vor.u32 %v371, %v374
      %v376 = vrot.slane %v375, 4
      %v378 = vshll.u32 %v258, 16
      %v380 = vrot.slane %v378, 5
      %v381 = vsel %vm271, %v376, %v380
      %v382 = vshrl.u32 %v258, 16
      %v384 = vrot.slane %v382, 4
      %v385 = vor.u32 %v384, %v380
      %v386 = vrot.slane %v385, 4
      %v388 = vshll.u32 %v259, 16
      %v390 = vrot.slane %v388, 5
      %v391 = vsel %vm271, %v386, %v390
      %v393 = vshrl.u32 %v260, 16
      %v395 = vrot.slane %v393, 4
      %v396 = vshll.u32 %v260, 16
      %v398 = vrot.slane %v396, 5
      %v399 = vor.u32 %v395, %v398
      %v400 = vrot.slane %v399, 4
      %v402 = vshll.u32 %v261, 16
      %v404 = vrot.slane %v402, 5
      %v405 = vsel %vm271, %v400, %v404
      %v406 = vshrl.u32 %v261, 16
      %v408 = vrot.slane %v406, 4
      %v409 = vor.u32 %v408, %v404
      %v410 = vrot.slane %v409, 4
      %v412 = vshll.u32 %v262, 16
      %v414 = vrot.slane %v412, 5
      %v415 = vsel %vm271, %v410, %v414
      %v417 = vshrl.u32 %v263, 16
      %v419 = vrot.slane %v417, 4
      %v420 = vshll.u32 %v263, 16
      %v422 = vrot.slane %v420, 5
      %v423 = vor.u32 %v419, %v422
      %v424 = vrot.slane %v423, 4
      %v426 = vshll.u32 %v264, 16
      %v428 = vrot.slane %v426, 5
      %v429 = vsel %vm271, %v424, %v428
      %v430 = vshrl.u32 %v264, 16
      %v432 = vrot.slane %v430, 4
      %v433 = vor.u32 %v432, %v428
      %v434 = vrot.slane %v433, 4
      %v436 = vshll.u32 %v265, 16
      %v438 = vrot.slane %v436, 5
      %v439 = vsel %vm271, %v434, %v438
      %v441 = vshrl.u32 %v266, 16
      %v443 = vrot.slane %v441, 4
      %v444 = vshll.u32 %v266, 16
      %v446 = vrot.slane %v444, 5
      %v447 = vor.u32 %v443, %v446
      %v448 = vrot.slane %v447, 4
      %v450 = vshll.u32 %v267, 16
      %v452 = vrot.slane %v450, 5
      %v453 = vsel %vm271, %v448, %v452
      %v454 = vshrl.u32 %v267, 16
      %v456 = vrot.slane %v454, 4
      %v457 = vor.u32 %v456, %v452
      %v458 = vrot.slane %v457, 4
      %v460 = vshll.u32 %v268, 16
      %v462 = vrot.slane %v460, 5
      %v463 = vsel %vm271, %v458, %v462
      %v464 = vunpack.c.l.b16 %v285
      %v465 = vunpack.c.l.b16 %v295
      %v466 = vunpack.c.l.b16 %v309
      %v467 = vunpack.c.l.b16 %v319
      %v468 = vunpack.c.l.b16 %v333
      %v469 = vunpack.c.l.b16 %v343
      %v470 = vunpack.c.l.b16 %v357
      %v471 = vunpack.c.l.b16 %v367
      %v472 = vunpack.c.l.b16 %v381
      %v473 = vunpack.c.l.b16 %v391
      %v474 = vunpack.c.l.b16 %v405
      %v475 = vunpack.c.l.b16 %v415
      %v476 = vunpack.c.l.b16 %v429
      %v477 = vunpack.c.l.b16 %v439
      %v478 = vunpack.c.l.b16 %v453
      %v479 = vunpack.c.l.b16 %v463
      %v480 = vpack.c.b16 %v465, %v464
      %v481 = vpack.c.b16 %v467, %v466
      %v482 = vpack.c.b16 %v469, %v468
      %v483 = vpack.c.b16 %v471, %v470
      %v484 = vpack.c.b16 %v473, %v472
      %v485 = vpack.c.b16 %v475, %v474
      %v486 = vpack.c.b16 %v477, %v476
      %v487 = vpack.c.b16 %v479, %v478
      %488 = vrot.lane.b32.xlu0 %v480, 4
      %v489 = vpop.permute.xlu0 %488
      %490 = vrot.lane.b32.xlu0 %v481, 4
      %v491 = vpop.permute.xlu0 %490
      %492 = vrot.lane.b32.xlu0 %v482, 4
      %v493 = vpop.permute.xlu0 %492
      %494 = vrot.lane.b32.xlu0 %v483, 4
      %v495 = vpop.permute.xlu0 %494
      %496 = vrot.lane.b32.xlu0 %v484, 4
      %v497 = vpop.permute.xlu0 %496
      %498 = vrot.lane.b32.xlu0 %v485, 4
      %v499 = vpop.permute.xlu0 %498
      %500 = vrot.lane.b32.xlu0 %v486, 4
      %v501 = vpop.permute.xlu0 %500
      %502 = vrot.lane.b32.xlu0 %v487, 4
      %v503 = vpop.permute.xlu0 %502
      %vm512 = vcmask 64544
      %513 = vst.msk [vmem:[#allocation2] sm:$0xff] %vm512, %v489
      %514 = vst.msk [vmem:[#allocation2 + $0x8] sm:$0xff] %vm512, %v491
      %515 = vst.msk [vmem:[#allocation2 + $0x10] sm:$0xff] %vm512, %v493
      %516 = vst.msk [vmem:[#allocation2 + $0x18] sm:$0xff] %vm512, %v495
      %517 = vst.msk [vmem:[#allocation2 + $0x20] sm:$0xff] %vm512, %v497
      %518 = vst.msk [vmem:[#allocation2 + $0x28] sm:$0xff] %vm512, %v499
      %519 = vst.msk [vmem:[#allocation2 + $0x30] sm:$0xff] %vm512, %v501
      %520 = vst.msk [vmem:[#allocation2 + $0x38] sm:$0xff] %vm512, %v503
      %v521 = vld [vmem:[%s165] sm:$0xe]
      %v522 = vld [vmem:[%s165 + $0x4] sm:$0xf]
      %v523 = vld [vmem:[%s165 + $0x8] sm:$0x1]
      %v524 = vld [vmem:[%s165 + $0xc] sm:$0xe]
      %v525 = vld [vmem:[%s165 + $0x10] sm:$0xf]
      %v526 = vld [vmem:[%s165 + $0x14] sm:$0x1]
      %v527 = vld [vmem:[%s165 + $0x18] sm:$0xe]
      %v528 = vld [vmem:[%s165 + $0x1c] sm:$0xf]
      %v529 = vld [vmem:[%s165 + $0x20] sm:$0x1]
      %v530 = vld [vmem:[%s165 + $0x24] sm:$0xe]
      %v531 = vld [vmem:[%s165 + $0x28] sm:$0xf]
      %v532 = vld [vmem:[%s165 + $0x2c] sm:$0x1]
      %v533 = vld [vmem:[%s165 + $0x30] sm:$0xe]
      %v534 = vld [vmem:[%s165 + $0x34] sm:$0xf]
      %v535 = vld [vmem:[%s165 + $0x38] sm:$0x1]
      %v536 = vld [vmem:[%s165 + $0x3c] sm:$0xe]
      %v537 = vld [vmem:[%s165 + $0x40] sm:$0xf]
      %v538 = vld [vmem:[%s165 + $0x44] sm:$0x1]
      %v539 = vld [vmem:[%s165 + $0x48] sm:$0xe]
      %v540 = vld [vmem:[%s165 + $0x4c] sm:$0xf]
      %v541 = vld [vmem:[%s165 + $0x50] sm:$0x1]
      %v542 = vld [vmem:[%s165 + $0x54] sm:$0xe]
      %v543 = vld [vmem:[%s165 + $0x58] sm:$0xf]
      %v544 = vld [vmem:[%s165 + $0x5c] sm:$0x1]
      %vm569 = vcmask 1042432
      %vm570 = vcmask 1046532
      %vm571 = vmor %vm569, %vm570
      %v572 = vrot.slane %v521, 5
      %v573 = vrot.slane %v572, 4
      %v574 = vrot.slane %v522, 5
      %v575 = vsel %vm571, %v573, %v574
      %v576 = vrot.slane %v574, 4
      %v577 = vrot.slane %v523, 5
      %v578 = vsel %vm571, %v576, %v577
      %v579 = vrot.slane %v524, 5
      %v580 = vrot.slane %v579, 4
      %v581 = vrot.slane %v525, 5
      %v582 = vsel %vm571, %v580, %v581
      %v583 = vrot.slane %v581, 4
      %v584 = vrot.slane %v526, 5
      %v585 = vsel %vm571, %v583, %v584
      %v586 = vrot.slane %v527, 5
      %v587 = vrot.slane %v586, 4
      %v588 = vrot.slane %v528, 5
      %v589 = vsel %vm571, %v587, %v588
      %v590 = vrot.slane %v588, 4
      %v591 = vrot.slane %v529, 5
      %v592 = vsel %vm571, %v590, %v591
      %v593 = vrot.slane %v530, 5
      %v594 = vrot.slane %v593, 4
      %v595 = vrot.slane %v531, 5
      %v596 = vsel %vm571, %v594, %v595
      %v597 = vrot.slane %v595, 4
      %v598 = vrot.slane %v532, 5
      %v599 = vsel %vm571, %v597, %v598
      %v600 = vrot.slane %v533, 5
      %v601 = vrot.slane %v600, 4
      %v602 = vrot.slane %v534, 5
      %v603 = vsel %vm571, %v601, %v602
      %v604 = vrot.slane %v602, 4
      %v605 = vrot.slane %v535, 5
      %v606 = vsel %vm571, %v604, %v605
      %v607 = vrot.slane %v536, 5
      %v608 = vrot.slane %v607, 4
      %v609 = vrot.slane %v537, 5
      %v610 = vsel %vm571, %v608, %v609
      %v611 = vrot.slane %v609, 4
      %v612 = vrot.slane %v538, 5
      %v613 = vsel %vm571, %v611, %v612
      %v614 = vrot.slane %v539, 5
      %v615 = vrot.slane %v614, 4
      %v616 = vrot.slane %v540, 5
      %v617 = vsel %vm571, %v615, %v616
      %v618 = vrot.slane %v616, 4
      %v619 = vrot.slane %v541, 5
      %v620 = vsel %vm571, %v618, %v619
      %v621 = vrot.slane %v542, 5
      %v622 = vrot.slane %v621, 4
      %v623 = vrot.slane %v543, 5
      %v624 = vsel %vm571, %v622, %v623
      %v625 = vrot.slane %v623, 4
      %v626 = vrot.slane %v544, 5
      %v627 = vsel %vm571, %v625, %v626
      %v628 = vunpack.c.l.b16 %v575
      %v629 = vunpack.c.l.b16 %v578
      %v630 = vunpack.c.l.b16 %v582
      %v631 = vunpack.c.l.b16 %v585
      %v632 = vunpack.c.l.b16 %v589
      %v633 = vunpack.c.l.b16 %v592
      %v634 = vunpack.c.l.b16 %v596
      %v635 = vunpack.c.l.b16 %v599
      %v636 = vunpack.c.l.b16 %v603
      %v637 = vunpack.c.l.b16 %v606
      %v638 = vunpack.c.l.b16 %v610
      %v639 = vunpack.c.l.b16 %v613
      %v640 = vunpack.c.l.b16 %v617
      %v641 = vunpack.c.l.b16 %v620
      %v642 = vunpack.c.l.b16 %v624
      %v643 = vunpack.c.l.b16 %v627
      %v644 = vpack.c.b16 %v629, %v628
      %v645 = vpack.c.b16 %v631, %v630
      %v646 = vpack.c.b16 %v633, %v632
      %v647 = vpack.c.b16 %v635, %v634
      %v648 = vpack.c.b16 %v637, %v636
      %v649 = vpack.c.b16 %v639, %v638
      %v650 = vpack.c.b16 %v641, %v640
      %v651 = vpack.c.b16 %v643, %v642
      %652 = vrot.lane.b32.xlu0 %v644, 8
      %v653 = vpop.permute.xlu0 %652
      %654 = vrot.lane.b32.xlu0 %v645, 8
      %v655 = vpop.permute.xlu0 %654
      %656 = vrot.lane.b32.xlu0 %v646, 8
      %v657 = vpop.permute.xlu0 %656
      %658 = vrot.lane.b32.xlu0 %v647, 8
      %v659 = vpop.permute.xlu0 %658
      %660 = vrot.lane.b32.xlu0 %v648, 8
      %v661 = vpop.permute.xlu0 %660
      %662 = vrot.lane.b32.xlu0 %v649, 8
      %v663 = vpop.permute.xlu0 %662
      %664 = vrot.lane.b32.xlu0 %v650, 8
      %v665 = vpop.permute.xlu0 %664
      %666 = vrot.lane.b32.xlu0 %v651, 8
      %v667 = vpop.permute.xlu0 %666
      %vm676 = vcmask 97344
      %677 = vst.msk [vmem:[#allocation2] sm:$0xff] %vm676, %v653
      %678 = vst.msk [vmem:[#allocation2 + $0x8] sm:$0xff] %vm676, %v655
      %679 = vst.msk [vmem:[#allocation2 + $0x10] sm:$0xff] %vm676, %v657
      %680 = vst.msk [vmem:[#allocation2 + $0x18] sm:$0xff] %vm676, %v659
      %681 = vst.msk [vmem:[#allocation2 + $0x20] sm:$0xff] %vm676, %v661
      %682 = vst.msk [vmem:[#allocation2 + $0x28] sm:$0xff] %vm676, %v663
      %683 = vst.msk [vmem:[#allocation2 + $0x30] sm:$0xff] %vm676, %v665
      %684 = vst.msk [vmem:[#allocation2 + $0x38] sm:$0xff] %vm676, %v667
      %s685 = scalar_lea.vmem %s165, 12
      %v686 = vld [vmem:[%s685] sm:$0xf]
      %v687 = vld [vmem:[%s685 + $0x4] sm:$0xf]
      %v688 = vld [vmem:[%s685 + $0xc] sm:$0xf]
      %v689 = vld [vmem:[%s685 + $0x10] sm:$0xf]
      %v690 = vld [vmem:[%s685 + $0x18] sm:$0xf]
      %v691 = vld [vmem:[%s685 + $0x1c] sm:$0xf]
      %v692 = vld [vmem:[%s685 + $0x24] sm:$0xf]
      %v693 = vld [vmem:[%s685 + $0x28] sm:$0xf]
      %v694 = vld [vmem:[%s685 + $0x30] sm:$0xf]
      %v695 = vld [vmem:[%s685 + $0x34] sm:$0xf]
      %v696 = vld [vmem:[%s685 + $0x3c] sm:$0xf]
      %v697 = vld [vmem:[%s685 + $0x40] sm:$0xf]
      %v698 = vld [vmem:[%s685 + $0x48] sm:$0xf]
      %v699 = vld [vmem:[%s685 + $0x4c] sm:$0xf]
      %v700 = vld [vmem:[%s685 + $0x54] sm:$0xf]
      %v701 = vld [vmem:[%s685 + $0x58] sm:$0xf]
      %v718 = vunpack.c.l.b16 %v686
      %v719 = vunpack.c.l.b16 %v687
      %v720 = vunpack.c.l.b16 %v688
      %v721 = vunpack.c.l.b16 %v689
      %v722 = vunpack.c.l.b16 %v690
      %v723 = vunpack.c.l.b16 %v691
      %v724 = vunpack.c.l.b16 %v692
      %v725 = vunpack.c.l.b16 %v693
      %v726 = vunpack.c.l.b16 %v694
      %v727 = vunpack.c.l.b16 %v695
      %v728 = vunpack.c.l.b16 %v696
      %v729 = vunpack.c.l.b16 %v697
      %v730 = vunpack.c.l.b16 %v698
      %v731 = vunpack.c.l.b16 %v699
      %v732 = vunpack.c.l.b16 %v700
      %v733 = vunpack.c.l.b16 %v701
      %v734 = vpack.c.b16 %v719, %v718
      %v735 = vpack.c.b16 %v721, %v720
      %v736 = vpack.c.b16 %v723, %v722
      %v737 = vpack.c.b16 %v725, %v724
      %v738 = vpack.c.b16 %v727, %v726
      %v739 = vpack.c.b16 %v729, %v728
      %v740 = vpack.c.b16 %v731, %v730
      %v741 = vpack.c.b16 %v733, %v732
      %742 = vrot.lane.b32.xlu0 %v734, 12
      %v743 = vpop.permute.xlu0 %742
      %744 = vrot.lane.b32.xlu0 %v735, 12
      %v745 = vpop.permute.xlu0 %744
      %746 = vrot.lane.b32.xlu0 %v736, 12
      %v747 = vpop.permute.xlu0 %746
      %748 = vrot.lane.b32.xlu0 %v737, 12
      %v749 = vpop.permute.xlu0 %748
      %750 = vrot.lane.b32.xlu0 %v738, 12
      %v751 = vpop.permute.xlu0 %750
      %752 = vrot.lane.b32.xlu0 %v739, 12
      %v753 = vpop.permute.xlu0 %752
      %754 = vrot.lane.b32.xlu0 %v740, 12
      %v755 = vpop.permute.xlu0 %754
      %756 = vrot.lane.b32.xlu0 %v741, 12
      %v757 = vpop.permute.xlu0 %756
      %vm766 = vcmask 130144
      %767 = vst.msk [vmem:[#allocation2] sm:$0xff] %vm766, %v743
      %768 = vst.msk [vmem:[#allocation2 + $0x8] sm:$0xff] %vm766, %v745
      %769 = vst.msk [vmem:[#allocation2 + $0x10] sm:$0xff] %vm766, %v747
      %770 = vst.msk [vmem:[#allocation2 + $0x18] sm:$0xff] %vm766, %v749
      %771 = vst.msk [vmem:[#allocation2 + $0x20] sm:$0xff] %vm766, %v751
      %772 = vst.msk [vmem:[#allocation2 + $0x28] sm:$0xff] %vm766, %v753
      %773 = vst.msk [vmem:[#allocation2 + $0x30] sm:$0xff] %vm766, %v755
      %774 = vst.msk [vmem:[#allocation2 + $0x38] sm:$0xff] %vm766, %v757
      %v775 = vld [vmem:[%s685] sm:$0xf]
      %v776 = vld [vmem:[%s685 + $0x4] sm:$0xf]
      %v777 = vld [vmem:[%s685 + $0x8] sm:$0x1]
      %v778 = vld [vmem:[%s685 + $0xc] sm:$0xf]
      %v779 = vld [vmem:[%s685 + $0x10] sm:$0xf]
      %v780 = vld [vmem:[%s685 + $0x14] sm:$0x1]
      %v781 = vld [vmem:[%s685 + $0x18] sm:$0xf]
      %v782 = vld [vmem:[%s685 + $0x1c] sm:$0xf]
      %v783 = vld [vmem:[%s685 + $0x20] sm:$0x1]
      %v784 = vld [vmem:[%s685 + $0x24] sm:$0xf]
      %v785 = vld [vmem:[%s685 + $0x28] sm:$0xf]
      %v786 = vld [vmem:[%s685 + $0x2c] sm:$0x1]
      %v787 = vld [vmem:[%s685 + $0x30] sm:$0xf]
      %v788 = vld [vmem:[%s685 + $0x34] sm:$0xf]
      %v789 = vld [vmem:[%s685 + $0x38] sm:$0x1]
      %v790 = vld [vmem:[%s685 + $0x3c] sm:$0xf]
      %v791 = vld [vmem:[%s685 + $0x40] sm:$0xf]
      %v792 = vld [vmem:[%s685 + $0x44] sm:$0x1]
      %v793 = vld [vmem:[%s685 + $0x48] sm:$0xf]
      %v794 = vld [vmem:[%s685 + $0x4c] sm:$0xf]
      %v795 = vld [vmem:[%s685 + $0x50] sm:$0x1]
      %v796 = vld [vmem:[%s685 + $0x54] sm:$0xf]
      %v797 = vld [vmem:[%s685 + $0x58] sm:$0xf]
      %v798 = vld [vmem:[%s685 + $0x5c] sm:$0x1]
      %v800 = vshrl.u32 %v775, 16
      %v802 = vrot.slane %v800, 4
      %v803 = vshll.u32 %v775, 16
      %v805 = vrot.slane %v803, 5
      %v806 = vor.u32 %v802, %v805
      %v807 = vrot.slane %v806, 4
      %v809 = vshll.u32 %v776, 16
      %v811 = vrot.slane %v809, 5
      %v812 = vsel %vm271, %v807, %v811
      %v813 = vshrl.u32 %v776, 16
      %v815 = vrot.slane %v813, 4
      %v816 = vor.u32 %v815, %v811
      %v817 = vrot.slane %v816, 4
      %v819 = vshll.u32 %v777, 16
      %v821 = vrot.slane %v819, 5
      %v822 = vsel %vm271, %v817, %v821
      %v824 = vshrl.u32 %v778, 16
      %v826 = vrot.slane %v824, 4
      %v827 = vshll.u32 %v778, 16
      %v829 = vrot.slane %v827, 5
      %v830 = vor.u32 %v826, %v829
      %v831 = vrot.slane %v830, 4
      %v833 = vshll.u32 %v779, 16
      %v835 = vrot.slane %v833, 5
      %v836 = vsel %vm271, %v831, %v835
      %v837 = vshrl.u32 %v779, 16
      %v839 = vrot.slane %v837, 4
      %v840 = vor.u32 %v839, %v835
      %v841 = vrot.slane %v840, 4
      %v843 = vshll.u32 %v780, 16
      %v845 = vrot.slane %v843, 5
      %v846 = vsel %vm271, %v841, %v845
      %v848 = vshrl.u32 %v781, 16
      %v850 = vrot.slane %v848, 4
      %v851 = vshll.u32 %v781, 16
      %v853 = vrot.slane %v851, 5
      %v854 = vor.u32 %v850, %v853
      %v855 = vrot.slane %v854, 4
      %v857 = vshll.u32 %v782, 16
      %v859 = vrot.slane %v857, 5
      %v860 = vsel %vm271, %v855, %v859
      %v861 = vshrl.u32 %v782, 16
      %v863 = vrot.slane %v861, 4
      %v864 = vor.u32 %v863, %v859
      %v865 = vrot.slane %v864, 4
      %v867 = vshll.u32 %v783, 16
      %v869 = vrot.slane %v867, 5
      %v870 = vsel %vm271, %v865, %v869
      %v872 = vshrl.u32 %v784, 16
      %v874 = vrot.slane %v872, 4
      %v875 = vshll.u32 %v784, 16
      %v877 = vrot.slane %v875, 5
      %v878 = vor.u32 %v874, %v877
      %v879 = vrot.slane %v878, 4
      %v881 = vshll.u32 %v785, 16
      %v883 = vrot.slane %v881, 5
      %v884 = vsel %vm271, %v879, %v883
      %v885 = vshrl.u32 %v785, 16
      %v887 = vrot.slane %v885, 4
      %v888 = vor.u32 %v887, %v883
      %v889 = vrot.slane %v888, 4
      %v891 = vshll.u32 %v786, 16
      %v893 = vrot.slane %v891, 5
      %v894 = vsel %vm271, %v889, %v893
      %v896 = vshrl.u32 %v787, 16
      %v898 = vrot.slane %v896, 4
      %v899 = vshll.u32 %v787, 16
      %v901 = vrot.slane %v899, 5
      %v902 = vor.u32 %v898, %v901
      %v903 = vrot.slane %v902, 4
      %v905 = vshll.u32 %v788, 16
      %v907 = vrot.slane %v905, 5
      %v908 = vsel %vm271, %v903, %v907
      %v909 = vshrl.u32 %v788, 16
      %v911 = vrot.slane %v909, 4
      %v912 = vor.u32 %v911, %v907
      %v913 = vrot.slane %v912, 4
      %v915 = vshll.u32 %v789, 16
      %v917 = vrot.slane %v915, 5
      %v918 = vsel %vm271, %v913, %v917
      %v920 = vshrl.u32 %v790, 16
      %v922 = vrot.slane %v920, 4
      %v923 = vshll.u32 %v790, 16
      %v925 = vrot.slane %v923, 5
      %v926 = vor.u32 %v922, %v925
      %v927 = vrot.slane %v926, 4
      %v929 = vshll.u32 %v791, 16
      %v931 = vrot.slane %v929, 5
      %v932 = vsel %vm271, %v927, %v931
      %v933 = vshrl.u32 %v791, 16
      %v935 = vrot.slane %v933, 4
      %v936 = vor.u32 %v935, %v931
      %v937 = vrot.slane %v936, 4
      %v939 = vshll.u32 %v792, 16
      %v941 = vrot.slane %v939, 5
      %v942 = vsel %vm271, %v937, %v941
      %v944 = vshrl.u32 %v793, 16
      %v946 = vrot.slane %v944, 4
      %v947 = vshll.u32 %v793, 16
      %v949 = vrot.slane %v947, 5
      %v950 = vor.u32 %v946, %v949
      %v951 = vrot.slane %v950, 4
      %v953 = vshll.u32 %v794, 16
      %v955 = vrot.slane %v953, 5
      %v956 = vsel %vm271, %v951, %v955
      %v957 = vshrl.u32 %v794, 16
      %v959 = vrot.slane %v957, 4
      %v960 = vor.u32 %v959, %v955
      %v961 = vrot.slane %v960, 4
      %v963 = vshll.u32 %v795, 16
      %v965 = vrot.slane %v963, 5
      %v966 = vsel %vm271, %v961, %v965
      %v968 = vshrl.u32 %v796, 16
      %v970 = vrot.slane %v968, 4
      %v971 = vshll.u32 %v796, 16
      %v973 = vrot.slane %v971, 5
      %v974 = vor.u32 %v970, %v973
      %v975 = vrot.slane %v974, 4
      %v977 = vshll.u32 %v797, 16
      %v979 = vrot.slane %v977, 5
      %v980 = vsel %vm271, %v975, %v979
      %v981 = vshrl.u32 %v797, 16
      %v983 = vrot.slane %v981, 4
      %v984 = vor.u32 %v983, %v979
      %v985 = vrot.slane %v984, 4
      %v987 = vshll.u32 %v798, 16
      %v989 = vrot.slane %v987, 5
      %v990 = vsel %vm271, %v985, %v989
      %v991 = vunpack.c.l.b16 %v812
      %v992 = vunpack.c.l.b16 %v822
      %v993 = vunpack.c.l.b16 %v836
      %v994 = vunpack.c.l.b16 %v846
      %v995 = vunpack.c.l.b16 %v860
      %v996 = vunpack.c.l.b16 %v870
      %v997 = vunpack.c.l.b16 %v884
      %v998 = vunpack.c.l.b16 %v894
      %v999 = vunpack.c.l.b16 %v908
      %v1000 = vunpack.c.l.b16 %v918
      %v1001 = vunpack.c.l.b16 %v932
      %v1002 = vunpack.c.l.b16 %v942
      %v1003 = vunpack.c.l.b16 %v956
      %v1004 = vunpack.c.l.b16 %v966
      %v1005 = vunpack.c.l.b16 %v980
      %v1006 = vunpack.c.l.b16 %v990
      %v1007 = vpack.c.b16 %v992, %v991
      %v1008 = vpack.c.b16 %v994, %v993
      %v1009 = vpack.c.b16 %v996, %v995
      %v1010 = vpack.c.b16 %v998, %v997
      %v1011 = vpack.c.b16 %v1000, %v999
      %v1012 = vpack.c.b16 %v1002, %v1001
      %v1013 = vpack.c.b16 %v1004, %v1003
      %v1014 = vpack.c.b16 %v1006, %v1005
      %1015 = vrot.lane.b32.xlu0 %v1007, 16
      %v1016 = vpop.permute.xlu0 %1015
      %1017 = vrot.lane.b32.xlu0 %v1008, 16
      %v1018 = vpop.permute.xlu0 %1017
      %1019 = vrot.lane.b32.xlu0 %v1009, 16
      %v1020 = vpop.permute.xlu0 %1019
      %1021 = vrot.lane.b32.xlu0 %v1010, 16
      %v1022 = vpop.permute.xlu0 %1021
      %1023 = vrot.lane.b32.xlu0 %v1011, 16
      %v1024 = vpop.permute.xlu0 %1023
      %1025 = vrot.lane.b32.xlu0 %v1012, 16
      %v1026 = vpop.permute.xlu0 %1025
      %1027 = vrot.lane.b32.xlu0 %v1013, 16
      %v1028 = vpop.permute.xlu0 %1027
      %1029 = vrot.lane.b32.xlu0 %v1014, 16
      %v1030 = vpop.permute.xlu0 %1029
      %vm1039 = vcmask 162944
      %1040 = vst.msk [vmem:[#allocation2] sm:$0xff] %vm1039, %v1016
      %1041 = vst.msk [vmem:[#allocation2 + $0x8] sm:$0xff] %vm1039, %v1018
      %1042 = vst.msk [vmem:[#allocation2 + $0x10] sm:$0xff] %vm1039, %v1020
      %1043 = vst.msk [vmem:[#allocation2 + $0x18] sm:$0xff] %vm1039, %v1022
      %1044 = vst.msk [vmem:[#allocation2 + $0x20] sm:$0xff] %vm1039, %v1024
      %1045 = vst.msk [vmem:[#allocation2 + $0x28] sm:$0xff] %vm1039, %v1026
      %1046 = vst.msk [vmem:[#allocation2 + $0x30] sm:$0xff] %vm1039, %v1028
      %1047 = vst.msk [vmem:[#allocation2 + $0x38] sm:$0xff] %vm1039, %v1030
      %v1048 = vld [vmem:[%s685] sm:$0xe]
      %v1049 = vld [vmem:[%s685 + $0x4] sm:$0xf]
      %v1050 = vld [vmem:[%s685 + $0x8] sm:$0x1]
      %v1051 = vld [vmem:[%s685 + $0xc] sm:$0xe]
      %v1052 = vld [vmem:[%s685 + $0x10] sm:$0xf]
      %v1053 = vld [vmem:[%s685 + $0x14] sm:$0x1]
      %v1054 = vld [vmem:[%s685 + $0x18] sm:$0xe]
      %v1055 = vld [vmem:[%s685 + $0x1c] sm:$0xf]
      %v1056 = vld [vmem:[%s685 + $0x20] sm:$0x1]
      %v1057 = vld [vmem:[%s685 + $0x24] sm:$0xe]
      %v1058 = vld [vmem:[%s685 + $0x28] sm:$0xf]
      %v1059 = vld [vmem:[%s685 + $0x2c] sm:$0x1]
      %v1060 = vld [vmem:[%s685 + $0x30] sm:$0xe]
      %v1061 = vld [vmem:[%s685 + $0x34] sm:$0xf]
      %v1062 = vld [vmem:[%s685 + $0x38] sm:$0x1]
      %v1063 = vld [vmem:[%s685 + $0x3c] sm:$0xe]
      %v1064 = vld [vmem:[%s685 + $0x40] sm:$0xf]
      %v1065 = vld [vmem:[%s685 + $0x44] sm:$0x1]
      %v1066 = vld [vmem:[%s685 + $0x48] sm:$0xe]
      %v1067 = vld [vmem:[%s685 + $0x4c] sm:$0xf]
      %v1068 = vld [vmem:[%s685 + $0x50] sm:$0x1]
      %v1069 = vld [vmem:[%s685 + $0x54] sm:$0xe]
      %v1070 = vld [vmem:[%s685 + $0x58] sm:$0xf]
      %v1071 = vld [vmem:[%s685 + $0x5c] sm:$0x1]
      %v1096 = vrot.slane %v1048, 5
      %v1097 = vrot.slane %v1096, 4
      %v1098 = vrot.slane %v1049, 5
      %v1099 = vsel %vm571, %v1097, %v1098
      %v1100 = vrot.slane %v1098, 4
      %v1101 = vrot.slane %v1050, 5
      %v1102 = vsel %vm571, %v1100, %v1101
      %v1103 = vrot.slane %v1051, 5
      %v1104 = vrot.slane %v1103, 4
      %v1105 = vrot.slane %v1052, 5
      %v1106 = vsel %vm571, %v1104, %v1105
      %v1107 = vrot.slane %v1105, 4
      %v1108 = vrot.slane %v1053, 5
      %v1109 = vsel %vm571, %v1107, %v1108
      %v1110 = vrot.slane %v1054, 5
      %v1111 = vrot.slane %v1110, 4
      %v1112 = vrot.slane %v1055, 5
      %v1113 = vsel %vm571, %v1111, %v1112
      %v1114 = vrot.slane %v1112, 4
      %v1115 = vrot.slane %v1056, 5
      %v1116 = vsel %vm571, %v1114, %v1115
      %v1117 = vrot.slane %v1057, 5
      %v1118 = vrot.slane %v1117, 4
      %v1119 = vrot.slane %v1058, 5
      %v1120 = vsel %vm571, %v1118, %v1119
      %v1121 = vrot.slane %v1119, 4
      %v1122 = vrot.slane %v1059, 5
      %v1123 = vsel %vm571, %v1121, %v1122
      %v1124 = vrot.slane %v1060, 5
      %v1125 = vrot.slane %v1124, 4
      %v1126 = vrot.slane %v1061, 5
      %v1127 = vsel %vm571, %v1125, %v1126
      %v1128 = vrot.slane %v1126, 4
      %v1129 = vrot.slane %v1062, 5
      %v1130 = vsel %vm571, %v1128, %v1129
      %v1131 = vrot.slane %v1063, 5
      %v1132 = vrot.slane %v1131, 4
      %v1133 = vrot.slane %v1064, 5
      %v1134 = vsel %vm571, %v1132, %v1133
      %v1135 = vrot.slane %v1133, 4
      %v1136 = vrot.slane %v1065, 5
      %v1137 = vsel %vm571, %v1135, %v1136
      %v1138 = vrot.slane %v1066, 5
      %v1139 = vrot.slane %v1138, 4
      %v1140 = vrot.slane %v1067, 5
      %v1141 = vsel %vm571, %v1139, %v1140
      %v1142 = vrot.slane %v1140, 4
      %v1143 = vrot.slane %v1068, 5
      %v1144 = vsel %vm571, %v1142, %v1143
      %v1145 = vrot.slane %v1069, 5
      %v1146 = vrot.slane %v1145, 4
      %v1147 = vrot.slane %v1070, 5
      %v1148 = vsel %vm571, %v1146, %v1147
      %v1149 = vrot.slane %v1147, 4
      %v1150 = vrot.slane %v1071, 5
      %v1151 = vsel %vm571, %v1149, %v1150
      %v1152 = vunpack.c.l.b16 %v1099
      %v1153 = vunpack.c.l.b16 %v1102
      %v1154 = vunpack.c.l.b16 %v1106
      %v1155 = vunpack.c.l.b16 %v1109
      %v1156 = vunpack.c.l.b16 %v1113
      %v1157 = vunpack.c.l.b16 %v1116
      %v1158 = vunpack.c.l.b16 %v1120
      %v1159 = vunpack.c.l.b16 %v1123
      %v1160 = vunpack.c.l.b16 %v1127
      %v1161 = vunpack.c.l.b16 %v1130
      %v1162 = vunpack.c.l.b16 %v1134
      %v1163 = vunpack.c.l.b16 %v1137
      %v1164 = vunpack.c.l.b16 %v1141
      %v1165 = vunpack.c.l.b16 %v1144
      %v1166 = vunpack.c.l.b16 %v1148
      %v1167 = vunpack.c.l.b16 %v1151
      %v1168 = vpack.c.b16 %v1153, %v1152
      %v1169 = vpack.c.b16 %v1155, %v1154
      %v1170 = vpack.c.b16 %v1157, %v1156
      %v1171 = vpack.c.b16 %v1159, %v1158
      %v1172 = vpack.c.b16 %v1161, %v1160
      %v1173 = vpack.c.b16 %v1163, %v1162
      %v1174 = vpack.c.b16 %v1165, %v1164
      %v1175 = vpack.c.b16 %v1167, %v1166
      %1176 = vrot.lane.b32.xlu0 %v1168, 20
      %v1177 = vpop.permute.xlu0 %1176
      %1178 = vrot.lane.b32.xlu0 %v1169, 20
      %v1179 = vpop.permute.xlu0 %1178
      %1180 = vrot.lane.b32.xlu0 %v1170, 20
      %v1181 = vpop.permute.xlu0 %1180
      %1182 = vrot.lane.b32.xlu0 %v1171, 20
      %v1183 = vpop.permute.xlu0 %1182
      %1184 = vrot.lane.b32.xlu0 %v1172, 20
      %v1185 = vpop.permute.xlu0 %1184
      %1186 = vrot.lane.b32.xlu0 %v1173, 20
      %v1187 = vpop.permute.xlu0 %1186
      %1188 = vrot.lane.b32.xlu0 %v1174, 20
      %v1189 = vpop.permute.xlu0 %1188
      %1190 = vrot.lane.b32.xlu0 %v1175, 20
      %v1191 = vpop.permute.xlu0 %1190
      %vm1200 = vcmask 195744
      %1201 = vst.msk [vmem:[#allocation2] sm:$0xff] %vm1200, %v1177
      %1202 = vst.msk [vmem:[#allocation2 + $0x8] sm:$0xff] %vm1200, %v1179
      %1203 = vst.msk [vmem:[#allocation2 + $0x10] sm:$0xff] %vm1200, %v1181
      %1204 = vst.msk [vmem:[#allocation2 + $0x18] sm:$0xff] %vm1200, %v1183
      %1205 = vst.msk [vmem:[#allocation2 + $0x20] sm:$0xff] %vm1200, %v1185
      %1206 = vst.msk [vmem:[#allocation2 + $0x28] sm:$0xff] %vm1200, %v1187
      %1207 = vst.msk [vmem:[#allocation2 + $0x30] sm:$0xff] %vm1200, %v1189
      %1208 = vst.msk [vmem:[#allocation2 + $0x38] sm:$0xff] %vm1200, %v1191
      %s1209 = scalar_lea.vmem %s165, 24
      %v1210 = vld [vmem:[%s1209] sm:$0xf]
      %v1211 = vld [vmem:[%s1209 + $0x4] sm:$0xf]
      %v1212 = vld [vmem:[%s1209 + $0xc] sm:$0xf]
      %v1213 = vld [vmem:[%s1209 + $0x10] sm:$0xf]
      %v1214 = vld [vmem:[%s1209 + $0x18] sm:$0xf]
      %v1215 = vld [vmem:[%s1209 + $0x1c] sm:$0xf]
      %v1216 = vld [vmem:[%s1209 + $0x24] sm:$0xf]
      %v1217 = vld [vmem:[%s1209 + $0x28] sm:$0xf]
      %v1218 = vld [vmem:[%s1209 + $0x30] sm:$0xf]
      %v1219 = vld [vmem:[%s1209 + $0x34] sm:$0xf]
      %v1220 = vld [vmem:[%s1209 + $0x3c] sm:$0xf]
      %v1221 = vld [vmem:[%s1209 + $0x40] sm:$0xf]
      %v1222 = vld [vmem:[%s1209 + $0x48] sm:$0xf]
      %v1223 = vld [vmem:[%s1209 + $0x4c] sm:$0xf]
      %v1224 = vld [vmem:[%s1209 + $0x54] sm:$0xf]
      %v1225 = vld [vmem:[%s1209 + $0x58] sm:$0xf]
      %v1242 = vunpack.c.l.b16 %v1210
      %v1243 = vunpack.c.l.b16 %v1211
      %v1244 = vunpack.c.l.b16 %v1212
      %v1245 = vunpack.c.l.b16 %v1213
      %v1246 = vunpack.c.l.b16 %v1214
      %v1247 = vunpack.c.l.b16 %v1215
      %v1248 = vunpack.c.l.b16 %v1216
      %v1249 = vunpack.c.l.b16 %v1217
      %v1250 = vunpack.c.l.b16 %v1218
      %v1251 = vunpack.c.l.b16 %v1219
      %v1252 = vunpack.c.l.b16 %v1220
      %v1253 = vunpack.c.l.b16 %v1221
      %v1254 = vunpack.c.l.b16 %v1222
      %v1255 = vunpack.c.l.b16 %v1223
      %v1256 = vunpack.c.l.b16 %v1224
      %v1257 = vunpack.c.l.b16 %v1225
      %v1258 = vpack.c.b16 %v1243, %v1242
      %v1259 = vpack.c.b16 %v1245, %v1244
      %v1260 = vpack.c.b16 %v1247, %v1246
      %v1261 = vpack.c.b16 %v1249, %v1248
      %v1262 = vpack.c.b16 %v1251, %v1250
      %v1263 = vpack.c.b16 %v1253, %v1252
      %v1264 = vpack.c.b16 %v1255, %v1254
      %v1265 = vpack.c.b16 %v1257, %v1256
      %1266 = vrot.lane.b32.xlu0 %v1258, 24
      %v1267 = vpop.permute.xlu0 %1266
      %1268 = vrot.lane.b32.xlu0 %v1259, 24
      %v1269 = vpop.permute.xlu0 %1268
      %1270 = vrot.lane.b32.xlu0 %v1260, 24
      %v1271 = vpop.permute.xlu0 %1270
      %1272 = vrot.lane.b32.xlu0 %v1261, 24
      %v1273 = vpop.permute.xlu0 %1272
      %1274 = vrot.lane.b32.xlu0 %v1262, 24
      %v1275 = vpop.permute.xlu0 %1274
      %1276 = vrot.lane.b32.xlu0 %v1263, 24
      %v1277 = vpop.permute.xlu0 %1276
      %1278 = vrot.lane.b32.xlu0 %v1264, 24
      %v1279 = vpop.permute.xlu0 %1278
      %1280 = vrot.lane.b32.xlu0 %v1265, 24
      %v1281 = vpop.permute.xlu0 %1280
      %vm1290 = vcmask 228544
      %1291 = vst.msk [vmem:[#allocation2] sm:$0xff] %vm1290, %v1267
      %1292 = vst.msk [vmem:[#allocation2 + $0x8] sm:$0xff] %vm1290, %v1269
      %1293 = vst.msk [vmem:[#allocation2 + $0x10] sm:$0xff] %vm1290, %v1271
      %1294 = vst.msk [vmem:[#allocation2 + $0x18] sm:$0xff] %vm1290, %v1273
      %1295 = vst.msk [vmem:[#allocation2 + $0x20] sm:$0xff] %vm1290, %v1275
      %1296 = vst.msk [vmem:[#allocation2 + $0x28] sm:$0xff] %vm1290, %v1277
      %1297 = vst.msk [vmem:[#allocation2 + $0x30] sm:$0xff] %vm1290, %v1279
      %1298 = vst.msk [vmem:[#allocation2 + $0x38] sm:$0xff] %vm1290, %v1281
      %v1299 = vld [vmem:[%s1209] sm:$0xf]
      %v1300 = vld [vmem:[%s1209 + $0x4] sm:$0xf]
      %v1301 = vld [vmem:[%s1209 + $0x8] sm:$0x1]
      %v1302 = vld [vmem:[%s1209 + $0xc] sm:$0xf]
      %v1303 = vld [vmem:[%s1209 + $0x10] sm:$0xf]
      %v1304 = vld [vmem:[%s1209 + $0x14] sm:$0x1]
      %v1305 = vld [vmem:[%s1209 + $0x18] sm:$0xf]
      %v1306 = vld [vmem:[%s1209 + $0x1c] sm:$0xf]
      %v1307 = vld [vmem:[%s1209 + $0x20] sm:$0x1]
      %v1308 = vld [vmem:[%s1209 + $0x24] sm:$0xf]
      %v1309 = vld [vmem:[%s1209 + $0x28] sm:$0xf]
      %v1310 = vld [vmem:[%s1209 + $0x2c] sm:$0x1]
      %v1311 = vld [vmem:[%s1209 + $0x30] sm:$0xf]
      %v1312 = vld [vmem:[%s1209 + $0x34] sm:$0xf]
      %v1313 = vld [vmem:[%s1209 + $0x38] sm:$0x1]
      %v1314 = vld [vmem:[%s1209 + $0x3c] sm:$0xf]
      %v1315 = vld [vmem:[%s1209 + $0x40] sm:$0xf]
      %v1316 = vld [vmem:[%s1209 + $0x44] sm:$0x1]
      %v1317 = vld [vmem:[%s1209 + $0x48] sm:$0xf]
      %v1318 = vld [vmem:[%s1209 + $0x4c] sm:$0xf]
      %v1319 = vld [vmem:[%s1209 + $0x50] sm:$0x1]
      %v1320 = vld [vmem:[%s1209 + $0x54] sm:$0xf]
      %v1321 = vld [vmem:[%s1209 + $0x58] sm:$0xf]
      %v1322 = vld [vmem:[%s1209 + $0x5c] sm:$0x1]
      %v1324 = vshrl.u32 %v1299, 16
      %v1326 = vrot.slane %v1324, 4
      %v1327 = vshll.u32 %v1299, 16
      %v1329 = vrot.slane %v1327, 5
      %v1330 = vor.u32 %v1326, %v1329
      %v1331 = vrot.slane %v1330, 4
      %v1333 = vshll.u32 %v1300, 16
      %v1335 = vrot.slane %v1333, 5
      %v1336 = vsel %vm271, %v1331, %v1335
      %v1337 = vshrl.u32 %v1300, 16
      %v1339 = vrot.slane %v1337, 4
      %v1340 = vor.u32 %v1339, %v1335
      %v1341 = vrot.slane %v1340, 4
      %v1343 = vshll.u32 %v1301, 16
      %v1345 = vrot.slane %v1343, 5
      %v1346 = vsel %vm271, %v1341, %v1345
      %v1348 = vshrl.u32 %v1302, 16
      %v1350 = vrot.slane %v1348, 4
      %v1351 = vshll.u32 %v1302, 16
      %v1353 = vrot.slane %v1351, 5
      %v1354 = vor.u32 %v1350, %v1353
      %v1355 = vrot.slane %v1354, 4
      %v1357 = vshll.u32 %v1303, 16
      %v1359 = vrot.slane %v1357, 5
      %v1360 = vsel %vm271, %v1355, %v1359
      %v1361 = vshrl.u32 %v1303, 16
      %v1363 = vrot.slane %v1361, 4
      %v1364 = vor.u32 %v1363, %v1359
      %v1365 = vrot.slane %v1364, 4
      %v1367 = vshll.u32 %v1304, 16
      %v1369 = vrot.slane %v1367, 5
      %v1370 = vsel %vm271, %v1365, %v1369
      %v1372 = vshrl.u32 %v1305, 16
      %v1374 = vrot.slane %v1372, 4
      %v1375 = vshll.u32 %v1305, 16
      %v1377 = vrot.slane %v1375, 5
      %v1378 = vor.u32 %v1374, %v1377
      %v1379 = vrot.slane %v1378, 4
      %v1381 = vshll.u32 %v1306, 16
      %v1383 = vrot.slane %v1381, 5
      %v1384 = vsel %vm271, %v1379, %v1383
      %v1385 = vshrl.u32 %v1306, 16
      %v1387 = vrot.slane %v1385, 4
      %v1388 = vor.u32 %v1387, %v1383
      %v1389 = vrot.slane %v1388, 4
      %v1391 = vshll.u32 %v1307, 16
      %v1393 = vrot.slane %v1391, 5
      %v1394 = vsel %vm271, %v1389, %v1393
      %v1396 = vshrl.u32 %v1308, 16
      %v1398 = vrot.slane %v1396, 4
      %v1399 = vshll.u32 %v1308, 16
      %v1401 = vrot.slane %v1399, 5
      %v1402 = vor.u32 %v1398, %v1401
      %v1403 = vrot.slane %v1402, 4
      %v1405 = vshll.u32 %v1309, 16
      %v1407 = vrot.slane %v1405, 5
      %v1408 = vsel %vm271, %v1403, %v1407
      %v1409 = vshrl.u32 %v1309, 16
      %v1411 = vrot.slane %v1409, 4
      %v1412 = vor.u32 %v1411, %v1407
      %v1413 = vrot.slane %v1412, 4
      %v1415 = vshll.u32 %v1310, 16
      %v1417 = vrot.slane %v1415, 5
      %v1418 = vsel %vm271, %v1413, %v1417
      %v1420 = vshrl.u32 %v1311, 16
      %v1422 = vrot.slane %v1420, 4
      %v1423 = vshll.u32 %v1311, 16
      %v1425 = vrot.slane %v1423, 5
      %v1426 = vor.u32 %v1422, %v1425
      %v1427 = vrot.slane %v1426, 4
      %v1429 = vshll.u32 %v1312, 16
      %v1431 = vrot.slane %v1429, 5
      %v1432 = vsel %vm271, %v1427, %v1431
      %v1433 = vshrl.u32 %v1312, 16
      %v1435 = vrot.slane %v1433, 4
      %v1436 = vor.u32 %v1435, %v1431
      %v1437 = vrot.slane %v1436, 4
      %v1439 = vshll.u32 %v1313, 16
      %v1441 = vrot.slane %v1439, 5
      %v1442 = vsel %vm271, %v1437, %v1441
      %v1444 = vshrl.u32 %v1314, 16
      %v1446 = vrot.slane %v1444, 4
      %v1447 = vshll.u32 %v1314, 16
      %v1449 = vrot.slane %v1447, 5
      %v1450 = vor.u32 %v1446, %v1449
      %v1451 = vrot.slane %v1450, 4
      %v1453 = vshll.u32 %v1315, 16
      %v1455 = vrot.slane %v1453, 5
      %v1456 = vsel %vm271, %v1451, %v1455
      %v1457 = vshrl.u32 %v1315, 16
      %v1459 = vrot.slane %v1457, 4
      %v1460 = vor.u32 %v1459, %v1455
      %v1461 = vrot.slane %v1460, 4
      %v1463 = vshll.u32 %v1316, 16
      %v1465 = vrot.slane %v1463, 5
      %v1466 = vsel %vm271, %v1461, %v1465
      %v1468 = vshrl.u32 %v1317, 16
      %v1470 = vrot.slane %v1468, 4
      %v1471 = vshll.u32 %v1317, 16
      %v1473 = vrot.slane %v1471, 5
      %v1474 = vor.u32 %v1470, %v1473
      %v1475 = vrot.slane %v1474, 4
      %v1477 = vshll.u32 %v1318, 16
      %v1479 = vrot.slane %v1477, 5
      %v1480 = vsel %vm271, %v1475, %v1479
      %v1481 = vshrl.u32 %v1318, 16
      %v1483 = vrot.slane %v1481, 4
      %v1484 = vor.u32 %v1483, %v1479
      %v1485 = vrot.slane %v1484, 4
      %v1487 = vshll.u32 %v1319, 16
      %v1489 = vrot.slane %v1487, 5
      %v1490 = vsel %vm271, %v1485, %v1489
      %v1492 = vshrl.u32 %v1320, 16
      %v1494 = vrot.slane %v1492, 4
      %v1495 = vshll.u32 %v1320, 16
      %v1497 = vrot.slane %v1495, 5
      %v1498 = vor.u32 %v1494, %v1497
      %v1499 = vrot.slane %v1498, 4
      %v1501 = vshll.u32 %v1321, 16
      %v1503 = vrot.slane %v1501, 5
      %v1504 = vsel %vm271, %v1499, %v1503
      %v1505 = vshrl.u32 %v1321, 16
      %v1507 = vrot.slane %v1505, 4
      %v1508 = vor.u32 %v1507, %v1503
      %v1509 = vrot.slane %v1508, 4
      %v1511 = vshll.u32 %v1322, 16
      %v1513 = vrot.slane %v1511, 5
      %v1514 = vsel %vm271, %v1509, %v1513
      %v1515 = vunpack.c.l.b16 %v1336
      %v1516 = vunpack.c.l.b16 %v1346
      %v1517 = vunpack.c.l.b16 %v1360
      %v1518 = vunpack.c.l.b16 %v1370
      %v1519 = vunpack.c.l.b16 %v1384
      %v1520 = vunpack.c.l.b16 %v1394
      %v1521 = vunpack.c.l.b16 %v1408
      %v1522 = vunpack.c.l.b16 %v1418
      %v1523 = vunpack.c.l.b16 %v1432
      %v1524 = vunpack.c.l.b16 %v1442
      %v1525 = vunpack.c.l.b16 %v1456
      %v1526 = vunpack.c.l.b16 %v1466
      %v1527 = vunpack.c.l.b16 %v1480
      %v1528 = vunpack.c.l.b16 %v1490
      %v1529 = vunpack.c.l.b16 %v1504
      %v1530 = vunpack.c.l.b16 %v1514
      %v1531 = vpack.c.b16 %v1516, %v1515
      %v1532 = vpack.c.b16 %v1518, %v1517
      %v1533 = vpack.c.b16 %v1520, %v1519
      %v1534 = vpack.c.b16 %v1522, %v1521
      %v1535 = vpack.c.b16 %v1524, %v1523
      %v1536 = vpack.c.b16 %v1526, %v1525
      %v1537 = vpack.c.b16 %v1528, %v1527
      %v1538 = vpack.c.b16 %v1530, %v1529
      %1539 = vrot.lane.b32.xlu0 %v1531, 28
      %v1540 = vpop.permute.xlu0 %1539
      %1541 = vrot.lane.b32.xlu0 %v1532, 28
      %v1542 = vpop.permute.xlu0 %1541
      %1543 = vrot.lane.b32.xlu0 %v1533, 28
      %v1544 = vpop.permute.xlu0 %1543
      %1545 = vrot.lane.b32.xlu0 %v1534, 28
      %v1546 = vpop.permute.xlu0 %1545
      %1547 = vrot.lane.b32.xlu0 %v1535, 28
      %v1548 = vpop.permute.xlu0 %1547
      %1549 = vrot.lane.b32.xlu0 %v1536, 28
      %v1550 = vpop.permute.xlu0 %1549
      %1551 = vrot.lane.b32.xlu0 %v1537, 28
      %v1552 = vpop.permute.xlu0 %1551
      %1553 = vrot.lane.b32.xlu0 %v1538, 28
      %v1554 = vpop.permute.xlu0 %1553
      %vm1563 = vcmask 261344
      %1564 = vst.msk [vmem:[#allocation2] sm:$0xff] %vm1563, %v1540
      %1565 = vst.msk [vmem:[#allocation2 + $0x8] sm:$0xff] %vm1563, %v1542
      %1566 = vst.msk [vmem:[#allocation2 + $0x10] sm:$0xff] %vm1563, %v1544
      %1567 = vst.msk [vmem:[#allocation2 + $0x18] sm:$0xff] %vm1563, %v1546
      %1568 = vst.msk [vmem:[#allocation2 + $0x20] sm:$0xff] %vm1563, %v1548
      %1569 = vst.msk [vmem:[#allocation2 + $0x28] sm:$0xff] %vm1563, %v1550
      %1570 = vst.msk [vmem:[#allocation2 + $0x30] sm:$0xff] %vm1563, %v1552
      %1571 = vst.msk [vmem:[#allocation2 + $0x38] sm:$0xff] %vm1563, %v1554
      %v1572 = vld [vmem:[%s1209] sm:$0xe]
      %v1573 = vld [vmem:[%s1209 + $0x4] sm:$0xf]
      %v1574 = vld [vmem:[%s1209 + $0x8] sm:$0x1]
      %v1575 = vld [vmem:[%s1209 + $0xc] sm:$0xe]
      %v1576 = vld [vmem:[%s1209 + $0x10] sm:$0xf]
      %v1577 = vld [vmem:[%s1209 + $0x14] sm:$0x1]
      %v1578 = vld [vmem:[%s1209 + $0x18] sm:$0xe]
      %v1579 = vld [vmem:[%s1209 + $0x1c] sm:$0xf]
      %v1580 = vld [vmem:[%s1209 + $0x20] sm:$0x1]
      %v1581 = vld [vmem:[%s1209 + $0x24] sm:$0xe]
      %v1582 = vld [vmem:[%s1209 + $0x28] sm:$0xf]
      %v1583 = vld [vmem:[%s1209 + $0x2c] sm:$0x1]
      %v1584 = vld [vmem:[%s1209 + $0x30] sm:$0xe]
      %v1585 = vld [vmem:[%s1209 + $0x34] sm:$0xf]
      %v1586 = vld [vmem:[%s1209 + $0x38] sm:$0x1]
      %v1587 = vld [vmem:[%s1209 + $0x3c] sm:$0xe]
      %v1588 = vld [vmem:[%s1209 + $0x40] sm:$0xf]
      %v1589 = vld [vmem:[%s1209 + $0x44] sm:$0x1]
      %v1590 = vld [vmem:[%s1209 + $0x48] sm:$0xe]
      %v1591 = vld [vmem:[%s1209 + $0x4c] sm:$0xf]
      %v1592 = vld [vmem:[%s1209 + $0x50] sm:$0x1]
      %v1593 = vld [vmem:[%s1209 + $0x54] sm:$0xe]
      %v1594 = vld [vmem:[%s1209 + $0x58] sm:$0xf]
      %v1595 = vld [vmem:[%s1209 + $0x5c] sm:$0x1]
      %v1620 = vrot.slane %v1572, 5
      %v1621 = vrot.slane %v1620, 4
      %v1622 = vrot.slane %v1573, 5
      %v1623 = vsel %vm571, %v1621, %v1622
      %v1624 = vrot.slane %v1622, 4
      %v1625 = vrot.slane %v1574, 5
      %v1626 = vsel %vm571, %v1624, %v1625
      %v1627 = vrot.slane %v1575, 5
      %v1628 = vrot.slane %v1627, 4
      %v1629 = vrot.slane %v1576, 5
      %v1630 = vsel %vm571, %v1628, %v1629
      %v1631 = vrot.slane %v1629, 4
      %v1632 = vrot.slane %v1577, 5
      %v1633 = vsel %vm571, %v1631, %v1632
      %v1634 = vrot.slane %v1578, 5
      %v1635 = vrot.slane %v1634, 4
      %v1636 = vrot.slane %v1579, 5
      %v1637 = vsel %vm571, %v1635, %v1636
      %v1638 = vrot.slane %v1636, 4
      %v1639 = vrot.slane %v1580, 5
      %v1640 = vsel %vm571, %v1638, %v1639
      %v1641 = vrot.slane %v1581, 5
      %v1642 = vrot.slane %v1641, 4
      %v1643 = vrot.slane %v1582, 5
      %v1644 = vsel %vm571, %v1642, %v1643
      %v1645 = vrot.slane %v1643, 4
      %v1646 = vrot.slane %v1583, 5
      %v1647 = vsel %vm571, %v1645, %v1646
      %v1648 = vrot.slane %v1584, 5
      %v1649 = vrot.slane %v1648, 4
      %v1650 = vrot.slane %v1585, 5
      %v1651 = vsel %vm571, %v1649, %v1650
      %v1652 = vrot.slane %v1650, 4
      %v1653 = vrot.slane %v1586, 5
      %v1654 = vsel %vm571, %v1652, %v1653
      %v1655 = vrot.slane %v1587, 5
      %v1656 = vrot.slane %v1655, 4
      %v1657 = vrot.slane %v1588, 5
      %v1658 = vsel %vm571, %v1656, %v1657
      %v1659 = vrot.slane %v1657, 4
      %v1660 = vrot.slane %v1589, 5
      %v1661 = vsel %vm571, %v1659, %v1660
      %v1662 = vrot.slane %v1590, 5
      %v1663 = vrot.slane %v1662, 4
      %v1664 = vrot.slane %v1591, 5
      %v1665 = vsel %vm571, %v1663, %v1664
      %v1666 = vrot.slane %v1664, 4
      %v1667 = vrot.slane %v1592, 5
      %v1668 = vsel %vm571, %v1666, %v1667
      %v1669 = vrot.slane %v1593, 5
      %v1670 = vrot.slane %v1669, 4
      %v1671 = vrot.slane %v1594, 5
      %v1672 = vsel %vm571, %v1670, %v1671
      %v1673 = vrot.slane %v1671, 4
      %v1674 = vrot.slane %v1595, 5
      %v1675 = vsel %vm571, %v1673, %v1674
      %v1676 = vunpack.c.l.b16 %v1623
      %v1677 = vunpack.c.l.b16 %v1626
      %v1678 = vunpack.c.l.b16 %v1630
      %v1679 = vunpack.c.l.b16 %v1633
      %v1680 = vunpack.c.l.b16 %v1637
      %v1681 = vunpack.c.l.b16 %v1640
      %v1682 = vunpack.c.l.b16 %v1644
      %v1683 = vunpack.c.l.b16 %v1647
      %v1684 = vunpack.c.l.b16 %v1651
      %v1685 = vunpack.c.l.b16 %v1654
      %v1686 = vunpack.c.l.b16 %v1658
      %v1687 = vunpack.c.l.b16 %v1661
      %v1688 = vunpack.c.l.b16 %v1665
      %v1689 = vunpack.c.l.b16 %v1668
      %v1690 = vunpack.c.l.b16 %v1672
      %v1691 = vunpack.c.l.b16 %v1675
      %v1692 = vpack.c.b16 %v1677, %v1676
      %v1693 = vpack.c.b16 %v1679, %v1678
      %v1694 = vpack.c.b16 %v1681, %v1680
      %v1695 = vpack.c.b16 %v1683, %v1682
      %v1696 = vpack.c.b16 %v1685, %v1684
      %v1697 = vpack.c.b16 %v1687, %v1686
      %v1698 = vpack.c.b16 %v1689, %v1688
      %v1699 = vpack.c.b16 %v1691, %v1690
      %1700 = vrot.lane.b32.xlu0 %v1692, 32
      %v1701 = vpop.permute.xlu0 %1700
      %1702 = vrot.lane.b32.xlu0 %v1693, 32
      %v1703 = vpop.permute.xlu0 %1702
      %1704 = vrot.lane.b32.xlu0 %v1694, 32
      %v1705 = vpop.permute.xlu0 %1704
      %1706 = vrot.lane.b32.xlu0 %v1695, 32
      %v1707 = vpop.permute.xlu0 %1706
      %1708 = vrot.lane.b32.xlu0 %v1696, 32
      %v1709 = vpop.permute.xlu0 %1708
      %1710 = vrot.lane.b32.xlu0 %v1697, 32
      %v1711 = vpop.permute.xlu0 %1710
      %1712 = vrot.lane.b32.xlu0 %v1698, 32
      %v1713 = vpop.permute.xlu0 %1712
      %1714 = vrot.lane.b32.xlu0 %v1699, 32
      %v1715 = vpop.permute.xlu0 %1714
      %vm1724 = vcmask 294144
      %1725 = vst.msk [vmem:[#allocation2] sm:$0xff] %vm1724, %v1701
      %1726 = vst.msk [vmem:[#allocation2 + $0x8] sm:$0xff] %vm1724, %v1703
      %1727 = vst.msk [vmem:[#allocation2 + $0x10] sm:$0xff] %vm1724, %v1705
      %1728 = vst.msk [vmem:[#allocation2 + $0x18] sm:$0xff] %vm1724, %v1707
      %1729 = vst.msk [vmem:[#allocation2 + $0x20] sm:$0xff] %vm1724, %v1709
      %1730 = vst.msk [vmem:[#allocation2 + $0x28] sm:$0xff] %vm1724, %v1711
      %1731 = vst.msk [vmem:[#allocation2 + $0x30] sm:$0xff] %vm1724, %v1713
      %1732 = vst.msk [vmem:[#allocation2 + $0x38] sm:$0xff] %vm1724, %v1715
      %v1733 = vld [vmem:[#allocation2] sm:$0xff]
      %v1734 = vld [vmem:[#allocation2 + $0x8] sm:$0xff]
      %v1735 = vld [vmem:[#allocation2 + $0x10] sm:$0xff]
      %v1736 = vld [vmem:[#allocation2 + $0x18] sm:$0xff]
      %v1737 = vld [vmem:[#allocation2 + $0x20] sm:$0xff]
      %v1738 = vld [vmem:[#allocation2 + $0x28] sm:$0xff]
      %v1739 = vld [vmem:[#allocation2 + $0x30] sm:$0xff]
      %v1740 = vld [vmem:[#allocation2 + $0x38] sm:$0xff]
      %v1741 = vld [vmem:[%s1] sm:$0xf]
      %v1742 = vld [vmem:[%s1 + $0x4] sm:$0xf]
      %v1743 = vld [vmem:[%s1 + $0x8] sm:$0xf]
      %v1744 = vld [vmem:[%s1 + $0xc] sm:$0xf]
      %v1745 = vld [vmem:[%s1 + $0x10] sm:$0x3]
      %v1746 = vld [vmem:[%s2] sm:$0x1]
      %v1748 = vlaneseq
      %v1749 = vshrl.u32 %v1748, 7
      %v1750 = vsub.s32 0, %v1749
      %v1751 = vrot.slane %v1746, %v1750
      %v1758 = vunpack.c.l.b16 %v1741
      %v1759 = vunpack.c.l.b16 %v1742
      %v1760 = vunpack.c.l.b16 %v1743
      %v1761 = vunpack.c.l.b16 %v1744
      %v1762 = vunpack.c.l.b16 %v1745
      %v1763 = vpack.c.b16 %v1759, %v1758
      %v1764 = vpack.c.b16 %v1761, %v1760
      %v1765 = vpack.c.b16 %v1762, %v1762
      %vm1768 = vcmask 293888
      %v1770 = vsel %vm1768, %v1733, 0
      %v1773 = vsel %vm1768, %v1734, 0
      %v1776 = vsel %vm1768, %v1735, 0
      %v1779 = vsel %vm1768, %v1736, 0
      %v1782 = vsel %vm1768, %v1737, 0
      %v1785 = vsel %vm1768, %v1738, 0
      %v1788 = vsel %vm1768, %v1739, 0
      %v1791 = vsel %vm1768, %v1740, 0
      %vm1793 = vcmask 1041408
      %v1795 = vsel %vm1793, %v1765, 0
      %1797 = vmatprep.subr.bf16.mxu0 0
      %1798 = vmatpush1.bf16.msra.mxu0 %v1763
      %1799 = vmatprep.subr.bf16.mxu0 0
      %1800 = vmatpush1.bf16.msra.mxu0 %v1764
      %1801 = vmatprep.subr.bf16.mxu0 0
      %1802 = vmatpush1.bf16.msra.mxu0 %v1795
      %1803 = vmatprep.subr.bf16.mxu0 0
      %1804 = vmatpush1.bf16.msra.mxu0 0
      %1805 = vmatprep.subr.bf16.mxu0 0
      %1806 = vmatpush1.bf16.msra.mxu0 0
      %1807 = vmatprep.subr.bf16.mxu0 0
      %1808 = vmatpush1.bf16.msra.mxu0 0
      %1809 = vmatprep.subr.bf16.mxu0 0
      %1810 = vmatpush1.bf16.msra.mxu0 0
      %1811 = vmatprep.subr.bf16.mxu0 0
      %1812 = vmatpush1.bf16.msra.mxu0 0
      %1813 = vmatprep.subr.bf16.mxu0 0
      %1814 = vmatpush1.bf16.msra.mxu0 0
      %1815 = vmatprep.subr.bf16.mxu0 0
      %1816 = vmatpush1.bf16.msra.mxu0 0
      %1817 = vmatprep.subr.bf16.mxu0 0
      %1818 = vmatpush1.bf16.msra.mxu0 0
      %1819 = vmatprep.subr.bf16.mxu0 0
      %1820 = vmatpush1.bf16.msra.mxu0 0
      %1821 = vmatprep.subr.bf16.mxu0 0
      %1822 = vmatpush1.bf16.msra.mxu0 0
      %1823 = vmatprep.subr.bf16.mxu0 0
      %1824 = vmatpush1.bf16.msra.mxu0 0
      %1825 = vmatprep.subr.bf16.mxu0 0
      %1826 = vmatpush1.bf16.msra.mxu0 0
      %1827 = vmatprep.subr.bf16.mxu0 0
      %1828 = vmatpush1.bf16.msra.mxu0 0
      %1829 = vmatprep.mubr.bf16.mxu0 0
      %1830 = vmatmul.mubr.bf16.gmra.mrb[0].mxu0 %v1770
      %v1831 = vpop.f32.mrb[0].mxu0
      %v1832 = vadd.f32 %v1751, %v1831
      %v1833 = vpop.f32.mrb[0].mxu0
      %v1834 = vpop.f32.mrb[0].mxu0
      %v1835 = vadd.f32 %v1751, %v1834
      %v1836 = vpop.f32.mrb[0].mxu0
      %1837 = vmatprep.mubr.bf16.mxu0 0
      %1838 = vmatmul.mubr.bf16.gmra.mrb[0].mxu0 %v1773
      %v1839 = vpop.f32.mrb[0].mxu0
      %v1840 = vadd.f32 %v1751, %v1839
      %v1841 = vpop.f32.mrb[0].mxu0
      %v1842 = vpop.f32.mrb[0].mxu0
      %v1843 = vadd.f32 %v1751, %v1842
      %v1844 = vpop.f32.mrb[0].mxu0
      %1845 = vmatprep.mubr.bf16.mxu0 0
      %1846 = vmatmul.mubr.bf16.gmra.mrb[0].mxu0 %v1776
      %v1847 = vpop.f32.mrb[0].mxu0
      %v1848 = vadd.f32 %v1751, %v1847
      %v1849 = vpop.f32.mrb[0].mxu0
      %v1850 = vpop.f32.mrb[0].mxu0
      %v1851 = vadd.f32 %v1751, %v1850
      %v1852 = vpop.f32.mrb[0].mxu0
      %1853 = vmatprep.mubr.bf16.mxu0 0
      %1854 = vmatmul.mubr.bf16.gmra.mrb[0].mxu0 %v1779
      %v1855 = vpop.f32.mrb[0].mxu0
      %v1856 = vadd.f32 %v1751, %v1855
      %v1857 = vpop.f32.mrb[0].mxu0
      %v1858 = vpop.f32.mrb[0].mxu0
      %v1859 = vadd.f32 %v1751, %v1858
      %v1860 = vpop.f32.mrb[0].mxu0
      %1861 = vmatprep.mubr.bf16.mxu0 0
      %1862 = vmatmul.mubr.bf16.gmra.mrb[0].mxu0 %v1782
      %v1863 = vpop.f32.mrb[0].mxu0
      %v1864 = vadd.f32 %v1751, %v1863
      %v1865 = vpop.f32.mrb[0].mxu0
      %v1866 = vpop.f32.mrb[0].mxu0
      %v1867 = vadd.f32 %v1751, %v1866
      %v1868 = vpop.f32.mrb[0].mxu0
      %1869 = vmatprep.mubr.bf16.mxu0 0
      %1870 = vmatmul.mubr.bf16.gmra.mrb[0].mxu0 %v1785
      %v1871 = vpop.f32.mrb[0].mxu0
      %v1872 = vadd.f32 %v1751, %v1871
      %v1873 = vpop.f32.mrb[0].mxu0
      %v1874 = vpop.f32.mrb[0].mxu0
      %v1875 = vadd.f32 %v1751, %v1874
      %v1876 = vpop.f32.mrb[0].mxu0
      %1877 = vmatprep.mubr.bf16.mxu0 0
      %1878 = vmatmul.mubr.bf16.gmra.mrb[0].mxu0 %v1788
      %v1879 = vpop.f32.mrb[0].mxu0
      %v1880 = vadd.f32 %v1751, %v1879
      %v1881 = vpop.f32.mrb[0].mxu0
      %v1882 = vpop.f32.mrb[0].mxu0
      %v1883 = vadd.f32 %v1751, %v1882
      %v1884 = vpop.f32.mrb[0].mxu0
      %1885 = vmatprep.mubr.bf16.mxu0 0
      %1886 = vmatmul.mubr.bf16.gmra.mrb[0].mxu0 %v1791
      %v1887 = vpop.f32.mrb[0].mxu0
      %v1888 = vadd.f32 %v1751, %v1887
      %v1889 = vpop.f32.mrb[0].mxu0
      %v1890 = vpop.f32.mrb[0].mxu0
      %v1891 = vadd.f32 %v1751, %v1890
      %v1892 = vpop.f32.mrb[0].mxu0
      %1893 = vdwg.mxu0
      %v1894 = vmax.f32 %v1832, 0.0
      %v1895 = vmax.f32 %v1835, 0.0
      %v1896 = vmax.f32 %v1840, 0.0
      %v1897 = vmax.f32 %v1843, 0.0
      %v1898 = vmax.f32 %v1848, 0.0
      %v1899 = vmax.f32 %v1851, 0.0
      %v1900 = vmax.f32 %v1856, 0.0
      %v1901 = vmax.f32 %v1859, 0.0
      %v1902 = vmax.f32 %v1864, 0.0
      %v1903 = vmax.f32 %v1867, 0.0
      %v1904 = vmax.f32 %v1872, 0.0
      %v1905 = vmax.f32 %v1875, 0.0
      %v1906 = vmax.f32 %v1880, 0.0
      %v1907 = vmax.f32 %v1883, 0.0
      %v1908 = vmax.f32 %v1888, 0.0
      %v1909 = vmax.f32 %v1891, 0.0
      %1910 = vst [vmem:[%s170] sm:$0xff] %v1894
      %1911 = vst [vmem:[%s170 + $0x8] sm:$0xff] %v1895
      %1912 = vst [vmem:[%s170 + $0x10] sm:$0xff] %v1896
      %1913 = vst [vmem:[%s170 + $0x18] sm:$0xff] %v1897
      %1914 = vst [vmem:[%s170 + $0x20] sm:$0xff] %v1898
      %1915 = vst [vmem:[%s170 + $0x28] sm:$0xff] %v1899
      %1916 = vst [vmem:[%s170 + $0x30] sm:$0xff] %v1900
      %1917 = vst [vmem:[%s170 + $0x38] sm:$0xff] %v1901
      %1918 = vst [vmem:[%s170 + $0x40] sm:$0xff] %v1902
      %1919 = vst [vmem:[%s170 + $0x48] sm:$0xff] %v1903
      %1920 = vst [vmem:[%s170 + $0x50] sm:$0xff] %v1904
      %1921 = vst [vmem:[%s170 + $0x58] sm:$0xff] %v1905
      %1922 = vst [vmem:[%s170 + $0x60] sm:$0xff] %v1906
      %1923 = vst [vmem:[%s170 + $0x68] sm:$0xff] %v1907
      %1924 = vst [vmem:[%s170 + $0x70] sm:$0xff] %v1908
      %1925 = vst [vmem:[%s170 + $0x78] sm:$0xff] %v1909
      %p1926 = scmp.lt.s32.totalorder %s14, 3
      %s1927 = scalar_select %p1926, %s14, 3
      %s1928 = smul.addr %s1927, 16
      %s1929 = smul.addr %s1928, 8
      %s1930 = scalar_lea.vmem %s3, %s1929
      // Predicated region
      $region33: #{conv_forward.1} parent=31 // pred_check
        %p1931 = pneg %p100
      $region34: #{conv_forward.1} parent=31 // pred_check_branch
        %1933 = sbr.rel (%p1931) target = $region36
      $region35: #{conv_forward.1} parent=31 // pred_region
        _
      $region36: #{conv_forward.1} parent=31 // pred_fallthru
        _
    $region32: #{conv_forward.1} parent=5 // pred_fallthru
      _
    %p1934 = scmp.le.s32.totalorder 2, %s9
    // Predicated region
    $region37: #{conv_forward.1} parent=5 // pred_check
      %p1935 = pneg %p1934
    $region38: #{conv_forward.1} parent=5 // pred_check_branch
      %1937 = sbr.rel (%p1935) target = $region40
    $region39: #{conv_forward.1} parent=5 // pred_region
      %s1938 = ssub.s32 %s9, 2
      // Predicated region
      $region41: #{conv_forward.1} parent=39 // pred_check
        %p1939 = pneg %p106
      $region42: #{conv_forward.1} parent=39 // pred_check_branch
        %1941 = sbr.rel (%p1939) target = $region44
      $region43: #{conv_forward.1} parent=39 // pred_region
        %p1942 = scmp.lt.s32.totalorder %s15, 3
        %s1943 = scalar_select %p1942, %s15, 3
        %s1944 = smul.addr %s1943, 16
        %s1945 = smul.addr %s1944, 8
        %s1946 = scalar_lea.vmem %s3, %s1945
      $region44: #{conv_forward.1} parent=39 // pred_fallthru
        _
    $region40: #{conv_forward.1} parent=5 // pred_fallthru
      _
  $region6: #{conv_forward.1} parent=0 // loop_footer
    %s13 = sadd.s32 1, %s9
  $region7: #{conv_forward.1} parent=0 // loop_footer_branch
    %8 = sbr.rel target = $region3
  $region8: #{conv_forward.1} parent=0 // loop_exit
    _

</llo_original>
